<compile_context>
chip_gen: v5e
topology: v5e:2x2
jax: 0.10.0
libtpu: 0.0.40
codegen_flags: <defaults>
</compile_context>

<pallas_src>
import functools

import jax
import jax.numpy as jnp
from jax import lax
from jax.experimental import pallas as pl
from jax.experimental.pallas import tpu as pltpu


def _basic_block_kernel(*refs, stride, Ho, Wo, Cin, P, proj):
    n_phase = 1 if stride == 1 else 4
    phases = refs[:n_phase]
    w1_ref, b1_ref, w2_ref, b2_ref = refs[n_phase:n_phase + 4]
    idx = n_phase + 4
    if proj:
        ws_ref, bs_ref = refs[idx:idx + 2]
        idx += 2
    out_ref = refs[idx]
    pad2_ref = refs[idx + 1]

    hw = Ho * Wo

    # ---- conv1 (3x3, stride s) + folded BN1 scale (in weights) + bias + ReLU
    # 9 accumulating tap matmuls straight off the (phase-split) padded input.
    acc1 = jnp.zeros((hw, P), jnp.float32)
    for kh in range(3):
        for kw in range(3):
            if stride == 1:
                tap = phases[0][pl.ds(kh, Ho), pl.ds(kw, Wo), :]
            else:
                # stride 2: polyphase -- tap is a contiguous slice of phase
                # (kh % 2, kw % 2) at offset (kh // 2, kw // 2).
                ph = phases[(kh % 2) * 2 + (kw % 2)]
                tap = ph[pl.ds(kh // 2, Ho), pl.ds(kw // 2, Wo), :]
            acc1 = acc1 + jnp.dot(tap.reshape(hw, Cin), w1_ref[kh * 3 + kw],
                                  preferred_element_type=jnp.float32)
    out1 = jnp.maximum(acc1 + b1_ref[...], 0.0)

    # ---- conv2 (3x3, stride 1, pad 1) in-kernel ------------------------------
    # zero only the 1-pixel halo (interior is fully overwritten every step).
    zrow = jnp.zeros((1, Wo + 2, P), pad2_ref.dtype)
    zcol = jnp.zeros((Ho + 2, 1, P), pad2_ref.dtype)
    pad2_ref[pl.ds(0, 1), :, :] = zrow
    pad2_ref[pl.ds(Ho + 1, 1), :, :] = zrow
    pad2_ref[:, pl.ds(0, 1), :] = zcol
    pad2_ref[:, pl.ds(Wo + 1, 1), :] = zcol
    pad2_ref[pl.ds(1, Ho), pl.ds(1, Wo), :] = (
        out1.astype(pad2_ref.dtype).reshape(Ho, Wo, P))

    acc2 = jnp.zeros((hw, P), jnp.float32)
    for kh in range(3):
        for kw in range(3):
            tap = pad2_ref[pl.ds(kh, Ho), pl.ds(kw, Wo), :]
            acc2 = acc2 + jnp.dot(tap.reshape(hw, P), w2_ref[kh * 3 + kw],
                                  preferred_element_type=jnp.float32)
    out2 = acc2 + b2_ref[...]

    # ---- shortcut -------------------------------------------------------------
    if stride == 1:
        xs = phases[0][pl.ds(1, Ho), pl.ds(1, Wo), :].reshape(hw, Cin)
    else:
        xs = phases[3][pl.ds(0, Ho), pl.ds(0, Wo), :].reshape(hw, Cin)
    if proj:
        sc = (jnp.dot(xs, ws_ref[...], preferred_element_type=jnp.float32)
              + bs_ref[...])
    else:
        sc = xs.astype(jnp.float32)          # identity: no MXU pass

    # ---- residual add + ReLU --------------------------------------------------
    out_ref[...] = jnp.maximum(out2 + sc, 0.0).astype(out_ref.dtype)


def basic_block_forward(x_nchw, params, stride):
    N, Cin, H, W = x_nchw.shape
    P = params["w1"].shape[-1]
    Ho = (H + 2 - 3) // stride + 1
    Wo = (W + 2 - 3) // stride + 1
    hw = Ho * Wo
    proj = "ws" in params

    x = jnp.transpose(x_nchw, (0, 2, 3, 1)).astype(jnp.bfloat16)   # NHWC, bf16
    xp = jnp.pad(x, ((0, 0), (1, 1), (1, 1), (0, 0)))              # 1-px zero pad

    if stride == 1:
        phase_arrays = [xp]
    else:
        # polyphase split (4 strided slices, ~1x input bytes total).
        phase_arrays = [xp[:, p::2, q::2, :] for p in (0, 1) for q in (0, 1)]

    # fold BN scales into the conv / shortcut weights (per output channel).
    w1 = (params["w1"] * params["s1"][0]).reshape(9, Cin, P).astype(jnp.bfloat16)
    w2 = (params["w2"] * params["s2"][0]).reshape(9, P, P).astype(jnp.bfloat16)
    b1, b2 = params["b1"], params["b2"]

    inputs = list(phase_arrays) + [w1, b1, w2, b2]
    in_specs = [pl.BlockSpec((None,) + tuple(ph.shape[1:]),
                             lambda n: (n, 0, 0, 0))
                for ph in phase_arrays]
    in_specs += [
        pl.BlockSpec((9, Cin, P), lambda n: (0, 0, 0)),
        pl.BlockSpec((1, P), lambda n: (0, 0)),
        pl.BlockSpec((9, P, P), lambda n: (0, 0, 0)),
        pl.BlockSpec((1, P), lambda n: (0, 0)),
    ]
    if proj:
        ws = (params["ws"] * params["ss"][0]).astype(jnp.bfloat16)
        inputs += [ws, params["bs"]]
        in_specs += [pl.BlockSpec((Cin, P), lambda n: (0, 0)),
                     pl.BlockSpec((1, P), lambda n: (0, 0))]

    kernel = functools.partial(_basic_block_kernel, stride=stride,
                               Ho=Ho, Wo=Wo, Cin=Cin, P=P, proj=proj)

    out = pl.pallas_call(
        kernel,
        out_shape=jax.ShapeDtypeStruct((N, hw, P), jnp.float32),
        grid=(N,),
        in_specs=in_specs,
        out_specs=pl.BlockSpec((None, hw, P), lambda n: (n, 0, 0)),
        scratch_shapes=[pltpu.VMEM((Ho + 2, Wo + 2, P), jnp.bfloat16)],
        compiler_params=pltpu.CompilerParams(
            dimension_semantics=("parallel",),
            vmem_limit_bytes=32 * 1024 * 1024),
    )(*inputs)

    return out.reshape(N, Ho, Wo, P).transpose(0, 3, 1, 2)          # back to NCHW


def init_params(key, in_planes, planes, stride, eps=1e-5):
    ks = jax.random.split(key, 16)

    def folded_bn(kg, kb, km, kv, c):
        gamma = 1.0 + 0.1 * jax.random.normal(kg, (c,), jnp.float32)
        beta = 0.1 * jax.random.normal(kb, (c,), jnp.float32)
        mean = 0.1 * jax.random.normal(km, (c,), jnp.float32)
        var = jnp.abs(jax.random.normal(kv, (c,), jnp.float32)) + 0.5
        scale = gamma / jnp.sqrt(var + eps)
        bias = beta - mean * scale
        return scale.reshape(1, c), bias.reshape(1, c)

    w1 = 0.2 * jax.random.normal(ks[0], (3, 3, in_planes, planes), jnp.float32)
    s1, b1 = folded_bn(ks[1], ks[2], ks[3], ks[4], planes)
    w2 = 0.2 * jax.random.normal(ks[5], (3, 3, planes, planes), jnp.float32)
    s2, b2 = folded_bn(ks[6], ks[7], ks[8], ks[9], planes)
    params = dict(w1=w1, s1=s1, b1=b1, w2=w2, s2=s2, b2=b2)

    if stride != 1 or in_planes != planes:
        ws = 0.2 * jax.random.normal(ks[10], (in_planes, planes), jnp.float32)
        ss, bs = folded_bn(ks[11], ks[12], ks[13], ks[14], planes)
        params.update(ws=ws, ss=ss, bs=bs)
    return params


def reference_forward(x_nchw, params, stride):
    """Pure-JAX reference matching the PyTorch forward (inference-mode BN)."""
    x = jnp.transpose(x_nchw, (0, 2, 3, 1)).astype(jnp.float32)

    def conv(v, w, s, pad):
        return lax.conv_general_dilated(
            v, w, (s, s), ((pad, pad), (pad, pad)),
            dimension_numbers=('NHWC', 'HWIO', 'NHWC'))

    o = conv(x, params["w1"], stride, 1) * params["s1"][0] + params["b1"][0]
    o = jnp.maximum(o, 0.0)
    o = conv(o, params["w2"], 1, 1) * params["s2"][0] + params["b2"][0]
    if "ws" in params:
        Cin = x.shape[-1]
        ws4 = params["ws"].reshape(1, 1, Cin, -1)
        sc = conv(x, ws4, stride, 0) * params["ss"][0] + params["bs"][0]
    else:
        sc = x
    o = jnp.maximum(o + sc, 0.0)
    return jnp.transpose(o, (0, 3, 1, 2))


if __name__ == "__main__":
    key = jax.random.PRNGKey(0)
    kx1, kx2, kp = jax.random.split(key, 3)

    # Case 1: downsampling block (in_planes=4 -> planes=8, stride=2)
    x = jax.random.normal(kx1, (2, 4, 16, 16), jnp.float32)      # NCHW input
    params = init_params(kp, 4, 8, 2)
    out = basic_block_forward(x, params, 2)
    jax.block_until_ready(out)
    ref = reference_forward(x, params, 2)
    assert out.shape == (2, 8, 8, 8)
    # tolerance sized for bf16 matmul operands vs. f32 reference
    assert jnp.allclose(out, ref, atol=1e-1, rtol=1e-1)

    # Case 2: identity-shortcut block (in_planes=planes=8, stride=1)
    x2 = jax.random.normal(kx2, (2, 8, 16, 16), jnp.float32)
    params2 = init_params(kp, 8, 8, 1)
    out2 = basic_block_forward(x2, params2, 1)
    jax.block_until_ready(out2)
    ref2 = reference_forward(x2, params2, 1)
    assert out2.shape == (2, 8, 16, 16)
    assert jnp.allclose(out2, ref2, atol=1e-1, rtol=1e-1)

    print("KERNEL_OK")
</pallas_src>

<mosaic_0001>
module attributes {stable_mosaic.version = 11 : i64} {
  func.func @_basic_block_kernel(%arg0: i32, %arg1: memref<1x9x9x4xbf16, #tpu.memory_space<vmem>>, %arg2: memref<1x9x9x4xbf16, #tpu.memory_space<vmem>>, %arg3: memref<1x9x9x4xbf16, #tpu.memory_space<vmem>>, %arg4: memref<1x9x9x4xbf16, #tpu.memory_space<vmem>>, %arg5: memref<9x4x8xbf16, #tpu.memory_space<vmem>>, %arg6: memref<1x8xf32, #tpu.memory_space<vmem>>, %arg7: memref<9x8x8xbf16, #tpu.memory_space<vmem>>, %arg8: memref<1x8xf32, #tpu.memory_space<vmem>>, %arg9: memref<4x8xbf16, #tpu.memory_space<vmem>>, %arg10: memref<1x8xf32, #tpu.memory_space<vmem>>, %arg11: memref<1x64x8xf32, #tpu.memory_space<vmem>>, %arg12: memref<10x10x8xbf16, #tpu.memory_space<vmem>>) attributes {dimension_semantics = [#tpu.dimension_semantics<parallel>], iteration_bounds = array<i64: 2>, scalar_prefetch = 0 : i64, scratch_operands = 1 : i64, tpu.core_type = #tpu.core_type<tc>, window_params = [{transform_indices = @transform_0, window_bounds = array<i64: 1, 9, 9, 4>}, {transform_indices = @transform_1, window_bounds = array<i64: 1, 9, 9, 4>}, {transform_indices = @transform_2, window_bounds = array<i64: 1, 9, 9, 4>}, {transform_indices = @transform_3, window_bounds = array<i64: 1, 9, 9, 4>}, {pipeline_mode = #tpu.pipeline_mode<synchronous>, transform_indices = @transform_4, window_bounds = array<i64: 9, 4, 8>}, {pipeline_mode = #tpu.pipeline_mode<synchronous>, transform_indices = @transform_5, window_bounds = array<i64: 1, 8>}, {pipeline_mode = #tpu.pipeline_mode<synchronous>, transform_indices = @transform_6, window_bounds = array<i64: 9, 8, 8>}, {pipeline_mode = #tpu.pipeline_mode<synchronous>, transform_indices = @transform_7, window_bounds = array<i64: 1, 8>}, {pipeline_mode = #tpu.pipeline_mode<synchronous>, transform_indices = @transform_8, window_bounds = array<i64: 4, 8>}, {pipeline_mode = #tpu.pipeline_mode<synchronous>, transform_indices = @transform_9, window_bounds = array<i64: 1, 8>}, {transform_indices = @transform_10, window_bounds = array<i64: 1, 64, 8>}]} {
    %cst = arith.constant 0.000000e+00 : f32
    %0 = vector.broadcast %cst : f32 to vector<64x8xf32>
    %c0 = arith.constant 0 : index
    %c0_0 = arith.constant 0 : index
    %c0_1 = arith.constant 0 : index
    %c0_2 = arith.constant 0 : index
    %1 = vector.load %arg1[%c0, %c0_0, %c0_1, %c0_2] : memref<1x9x9x4xbf16, #tpu.memory_space<vmem>>, vector<1x8x8x4xbf16>
    %2 = vector.shape_cast %1 : vector<1x8x8x4xbf16> to vector<8x8x4xbf16>
    %3 = vector.shape_cast %2 : vector<8x8x4xbf16> to vector<64x4xbf16>
    %c0_3 = arith.constant 0 : index
    %c0_4 = arith.constant 0 : index
    %c0_5 = arith.constant 0 : index
    %4 = vector.load %arg5[%c0_3, %c0_4, %c0_5] : memref<9x4x8xbf16, #tpu.memory_space<vmem>>, vector<1x4x8xbf16>
    %5 = vector.shape_cast %4 : vector<1x4x8xbf16> to vector<4x8xbf16>
    %cst_6 = arith.constant dense<0.000000e+00> : vector<64x8xf32>
    %6 = tpu.matmul %3, %5, %cst_6 {dimension_numbers = #tpu.dot_dimension_numbers<[1], [0], [0], [1], [0, 0, 1, 1], [], []>} : vector<64x4xbf16>, vector<4x8xbf16>, vector<64x8xf32> -> vector<64x8xf32>
    %7 = arith.addf %0, %6 : vector<64x8xf32>
    %c0_7 = arith.constant 0 : index
    %c0_8 = arith.constant 0 : index
    %c0_9 = arith.constant 0 : index
    %c0_10 = arith.constant 0 : index
    %8 = vector.load %arg2[%c0_7, %c0_8, %c0_9, %c0_10] : memref<1x9x9x4xbf16, #tpu.memory_space<vmem>>, vector<1x8x8x4xbf16>
    %9 = vector.shape_cast %8 : vector<1x8x8x4xbf16> to vector<8x8x4xbf16>
    %10 = vector.shape_cast %9 : vector<8x8x4xbf16> to vector<64x4xbf16>
    %c1 = arith.constant 1 : index
    %c0_11 = arith.constant 0 : index
    %c0_12 = arith.constant 0 : index
    %11 = vector.load %arg5[%c1, %c0_11, %c0_12] : memref<9x4x8xbf16, #tpu.memory_space<vmem>>, vector<1x4x8xbf16>
    %12 = vector.shape_cast %11 : vector<1x4x8xbf16> to vector<4x8xbf16>
    %cst_13 = arith.constant dense<0.000000e+00> : vector<64x8xf32>
    %13 = tpu.matmul %10, %12, %cst_13 {dimension_numbers = #tpu.dot_dimension_numbers<[1], [0], [0], [1], [0, 0, 1, 1], [], []>} : vector<64x4xbf16>, vector<4x8xbf16>, vector<64x8xf32> -> vector<64x8xf32>
    %14 = arith.addf %7, %13 : vector<64x8xf32>
    %c0_14 = arith.constant 0 : index
    %c0_15 = arith.constant 0 : index
    %c1_16 = arith.constant 1 : index
    %c0_17 = arith.constant 0 : index
    %15 = vector.load %arg1[%c0_14, %c0_15, %c1_16, %c0_17] : memref<1x9x9x4xbf16, #tpu.memory_space<vmem>>, vector<1x8x8x4xbf16>
    %16 = vector.shape_cast %15 : vector<1x8x8x4xbf16> to vector<8x8x4xbf16>
    %17 = vector.shape_cast %16 : vector<8x8x4xbf16> to vector<64x4xbf16>
    %c2 = arith.constant 2 : index
    %c0_18 = arith.constant 0 : index
    %c0_19 = arith.constant 0 : index
    %18 = vector.load %arg5[%c2, %c0_18, %c0_19] : memref<9x4x8xbf16, #tpu.memory_space<vmem>>, vector<1x4x8xbf16>
    %19 = vector.shape_cast %18 : vector<1x4x8xbf16> to vector<4x8xbf16>
    %cst_20 = arith.constant dense<0.000000e+00> : vector<64x8xf32>
    %20 = tpu.matmul %17, %19, %cst_20 {dimension_numbers = #tpu.dot_dimension_numbers<[1], [0], [0], [1], [0, 0, 1, 1], [], []>} : vector<64x4xbf16>, vector<4x8xbf16>, vector<64x8xf32> -> vector<64x8xf32>
    %21 = arith.addf %14, %20 : vector<64x8xf32>
    %c0_21 = arith.constant 0 : index
    %c0_22 = arith.constant 0 : index
    %c0_23 = arith.constant 0 : index
    %c0_24 = arith.constant 0 : index
    %22 = vector.load %arg3[%c0_21, %c0_22, %c0_23, %c0_24] : memref<1x9x9x4xbf16, #tpu.memory_space<vmem>>, vector<1x8x8x4xbf16>
    %23 = vector.shape_cast %22 : vector<1x8x8x4xbf16> to vector<8x8x4xbf16>
    %24 = vector.shape_cast %23 : vector<8x8x4xbf16> to vector<64x4xbf16>
    %c3 = arith.constant 3 : index
    %c0_25 = arith.constant 0 : index
    %c0_26 = arith.constant 0 : index
    %25 = vector.load %arg5[%c3, %c0_25, %c0_26] : memref<9x4x8xbf16, #tpu.memory_space<vmem>>, vector<1x4x8xbf16>
    %26 = vector.shape_cast %25 : vector<1x4x8xbf16> to vector<4x8xbf16>
    %cst_27 = arith.constant dense<0.000000e+00> : vector<64x8xf32>
    %27 = tpu.matmul %24, %26, %cst_27 {dimension_numbers = #tpu.dot_dimension_numbers<[1], [0], [0], [1], [0, 0, 1, 1], [], []>} : vector<64x4xbf16>, vector<4x8xbf16>, vector<64x8xf32> -> vector<64x8xf32>
    %28 = arith.addf %21, %27 : vector<64x8xf32>
    %c0_28 = arith.constant 0 : index
    %c0_29 = arith.constant 0 : index
    %c0_30 = arith.constant 0 : index
    %c0_31 = arith.constant 0 : index
    %29 = vector.load %arg4[%c0_28, %c0_29, %c0_30, %c0_31] : memref<1x9x9x4xbf16, #tpu.memory_space<vmem>>, vector<1x8x8x4xbf16>
    %30 = vector.shape_cast %29 : vector<1x8x8x4xbf16> to vector<8x8x4xbf16>
    %31 = vector.shape_cast %30 : vector<8x8x4xbf16> to vector<64x4xbf16>
    %c4 = arith.constant 4 : index
    %c0_32 = arith.constant 0 : index
    %c0_33 = arith.constant 0 : index
    %32 = vector.load %arg5[%c4, %c0_32, %c0_33] : memref<9x4x8xbf16, #tpu.memory_space<vmem>>, vector<1x4x8xbf16>
    %33 = vector.shape_cast %32 : vector<1x4x8xbf16> to vector<4x8xbf16>
    %cst_34 = arith.constant dense<0.000000e+00> : vector<64x8xf32>
    %34 = tpu.matmul %31, %33, %cst_34 {dimension_numbers = #tpu.dot_dimension_numbers<[1], [0], [0], [1], [0, 0, 1, 1], [], []>} : vector<64x4xbf16>, vector<4x8xbf16>, vector<64x8xf32> -> vector<64x8xf32>
    %35 = arith.addf %28, %34 : vector<64x8xf32>
    %c0_35 = arith.constant 0 : index
    %c0_36 = arith.constant 0 : index
    %c1_37 = arith.constant 1 : index
    %c0_38 = arith.constant 0 : index
    %36 = vector.load %arg3[%c0_35, %c0_36, %c1_37, %c0_38] : memref<1x9x9x4xbf16, #tpu.memory_space<vmem>>, vector<1x8x8x4xbf16>
    %37 = vector.shape_cast %36 : vector<1x8x8x4xbf16> to vector<8x8x4xbf16>
    %38 = vector.shape_cast %37 : vector<8x8x4xbf16> to vector<64x4xbf16>
    %c5 = arith.constant 5 : index
    %c0_39 = arith.constant 0 : index
    %c0_40 = arith.constant 0 : index
    %39 = vector.load %arg5[%c5, %c0_39, %c0_40] : memref<9x4x8xbf16, #tpu.memory_space<vmem>>, vector<1x4x8xbf16>
    %40 = vector.shape_cast %39 : vector<1x4x8xbf16> to vector<4x8xbf16>
    %cst_41 = arith.constant dense<0.000000e+00> : vector<64x8xf32>
    %41 = tpu.matmul %38, %40, %cst_41 {dimension_numbers = #tpu.dot_dimension_numbers<[1], [0], [0], [1], [0, 0, 1, 1], [], []>} : vector<64x4xbf16>, vector<4x8xbf16>, vector<64x8xf32> -> vector<64x8xf32>
    %42 = arith.addf %35, %41 : vector<64x8xf32>
    %c0_42 = arith.constant 0 : index
    %c1_43 = arith.constant 1 : index
    %c0_44 = arith.constant 0 : index
    %c0_45 = arith.constant 0 : index
    %43 = vector.load %arg1[%c0_42, %c1_43, %c0_44, %c0_45] : memref<1x9x9x4xbf16, #tpu.memory_space<vmem>>, vector<1x8x8x4xbf16>
    %44 = vector.shape_cast %43 : vector<1x8x8x4xbf16> to vector<8x8x4xbf16>
    %45 = vector.shape_cast %44 : vector<8x8x4xbf16> to vector<64x4xbf16>
    %c6 = arith.constant 6 : index
    %c0_46 = arith.constant 0 : index
    %c0_47 = arith.constant 0 : index
    %46 = vector.load %arg5[%c6, %c0_46, %c0_47] : memref<9x4x8xbf16, #tpu.memory_space<vmem>>, vector<1x4x8xbf16>
    %47 = vector.shape_cast %46 : vector<1x4x8xbf16> to vector<4x8xbf16>
    %cst_48 = arith.constant dense<0.000000e+00> : vector<64x8xf32>
    %48 = tpu.matmul %45, %47, %cst_48 {dimension_numbers = #tpu.dot_dimension_numbers<[1], [0], [0], [1], [0, 0, 1, 1], [], []>} : vector<64x4xbf16>, vector<4x8xbf16>, vector<64x8xf32> -> vector<64x8xf32>
    %49 = arith.addf %42, %48 : vector<64x8xf32>
    %c0_49 = arith.constant 0 : index
    %c1_50 = arith.constant 1 : index
    %c0_51 = arith.constant 0 : index
    %c0_52 = arith.constant 0 : index
    %50 = vector.load %arg2[%c0_49, %c1_50, %c0_51, %c0_52] : memref<1x9x9x4xbf16, #tpu.memory_space<vmem>>, vector<1x8x8x4xbf16>
    %51 = vector.shape_cast %50 : vector<1x8x8x4xbf16> to vector<8x8x4xbf16>
    %52 = vector.shape_cast %51 : vector<8x8x4xbf16> to vector<64x4xbf16>
    %c7 = arith.constant 7 : index
    %c0_53 = arith.constant 0 : index
    %c0_54 = arith.constant 0 : index
    %53 = vector.load %arg5[%c7, %c0_53, %c0_54] : memref<9x4x8xbf16, #tpu.memory_space<vmem>>, vector<1x4x8xbf16>
    %54 = vector.shape_cast %53 : vector<1x4x8xbf16> to vector<4x8xbf16>
    %cst_55 = arith.constant dense<0.000000e+00> : vector<64x8xf32>
    %55 = tpu.matmul %52, %54, %cst_55 {dimension_numbers = #tpu.dot_dimension_numbers<[1], [0], [0], [1], [0, 0, 1, 1], [], []>} : vector<64x4xbf16>, vector<4x8xbf16>, vector<64x8xf32> -> vector<64x8xf32>
    %56 = arith.addf %49, %55 : vector<64x8xf32>
    %c0_56 = arith.constant 0 : index
    %c1_57 = arith.constant 1 : index
    %c1_58 = arith.constant 1 : index
    %c0_59 = arith.constant 0 : index
    %57 = vector.load %arg1[%c0_56, %c1_57, %c1_58, %c0_59] : memref<1x9x9x4xbf16, #tpu.memory_space<vmem>>, vector<1x8x8x4xbf16>
    %58 = vector.shape_cast %57 : vector<1x8x8x4xbf16> to vector<8x8x4xbf16>
    %59 = vector.shape_cast %58 : vector<8x8x4xbf16> to vector<64x4xbf16>
    %c8 = arith.constant 8 : index
    %c0_60 = arith.constant 0 : index
    %c0_61 = arith.constant 0 : index
    %60 = vector.load %arg5[%c8, %c0_60, %c0_61] : memref<9x4x8xbf16, #tpu.memory_space<vmem>>, vector<1x4x8xbf16>
    %61 = vector.shape_cast %60 : vector<1x4x8xbf16> to vector<4x8xbf16>
    %cst_62 = arith.constant dense<0.000000e+00> : vector<64x8xf32>
    %62 = tpu.matmul %59, %61, %cst_62 {dimension_numbers = #tpu.dot_dimension_numbers<[1], [0], [0], [1], [0, 0, 1, 1], [], []>} : vector<64x4xbf16>, vector<4x8xbf16>, vector<64x8xf32> -> vector<64x8xf32>
    %63 = arith.addf %56, %62 : vector<64x8xf32>
    %c0_63 = arith.constant 0 : index
    %c0_64 = arith.constant 0 : index
    %64 = vector.load %arg6[%c0_63, %c0_64] : memref<1x8xf32, #tpu.memory_space<vmem>>, vector<1x8xf32>
    %65 = vector.broadcast %64 : vector<1x8xf32> to vector<64x8xf32>
    %66 = arith.addf %63, %65 : vector<64x8xf32>
    %cst_65 = arith.constant 0.000000e+00 : f32
    %67 = vector.broadcast %cst_65 : f32 to vector<64x8xf32>
    %68 = arith.maximumf %66, %67 : vector<64x8xf32>
    %cst_66 = arith.constant 0.000000e+00 : bf16
    %69 = vector.broadcast %cst_66 : bf16 to vector<1x10x8xbf16>
    %cst_67 = arith.constant 0.000000e+00 : bf16
    %70 = vector.broadcast %cst_67 : bf16 to vector<10x1x8xbf16>
    %c0_68 = arith.constant 0 : index
    %c0_69 = arith.constant 0 : index
    %c0_70 = arith.constant 0 : index
    %71 = vector.load %arg12[%c0_68, %c0_69, %c0_70] : memref<10x10x8xbf16, #tpu.memory_space<vmem>>, vector<1x10x8xbf16>
    tpu.vector_store %arg12[%c0_68, %c0_69, %c0_70], %69 {strides = array<i32>} : memref<10x10x8xbf16, #tpu.memory_space<vmem>>, vector<1x10x8xbf16>,
    %c9 = arith.constant 9 : index
    %c0_71 = arith.constant 0 : index
    %c0_72 = arith.constant 0 : index
    %72 = vector.load %arg12[%c9, %c0_71, %c0_72] : memref<10x10x8xbf16, #tpu.memory_space<vmem>>, vector<1x10x8xbf16>
    tpu.vector_store %arg12[%c9, %c0_71, %c0_72], %69 {strides = array<i32>} : memref<10x10x8xbf16, #tpu.memory_space<vmem>>, vector<1x10x8xbf16>,
    %c0_73 = arith.constant 0 : index
    %c0_74 = arith.constant 0 : index
    %c0_75 = arith.constant 0 : index
    %73 = vector.load %arg12[%c0_73, %c0_74, %c0_75] : memref<10x10x8xbf16, #tpu.memory_space<vmem>>, vector<10x1x8xbf16>
    tpu.vector_store %arg12[%c0_73, %c0_74, %c0_75], %70 {strides = array<i32>} : memref<10x10x8xbf16, #tpu.memory_space<vmem>>, vector<10x1x8xbf16>,
    %c0_76 = arith.constant 0 : index
    %c9_77 = arith.constant 9 : index
    %c0_78 = arith.constant 0 : index
    %74 = vector.load %arg12[%c0_76, %c9_77, %c0_78] : memref<10x10x8xbf16, #tpu.memory_space<vmem>>, vector<10x1x8xbf16>
    tpu.vector_store %arg12[%c0_76, %c9_77, %c0_78], %70 {strides = array<i32>} : memref<10x10x8xbf16, #tpu.memory_space<vmem>>, vector<10x1x8xbf16>,
    %75 = arith.truncf %68 : vector<64x8xf32> to vector<64x8xbf16>
    %76 = vector.shape_cast %75 : vector<64x8xbf16> to vector<8x8x8xbf16>
    %c1_79 = arith.constant 1 : index
    %c1_80 = arith.constant 1 : index
    %c0_81 = arith.constant 0 : index
    %77 = vector.load %arg12[%c1_79, %c1_80, %c0_81] : memref<10x10x8xbf16, #tpu.memory_space<vmem>>, vector<8x8x8xbf16>
    tpu.vector_store %arg12[%c1_79, %c1_80, %c0_81], %76 {strides = array<i32>} : memref<10x10x8xbf16, #tpu.memory_space<vmem>>, vector<8x8x8xbf16>,
    %cst_82 = arith.constant 0.000000e+00 : f32
    %78 = vector.broadcast %cst_82 : f32 to vector<64x8xf32>
    %c0_83 = arith.constant 0 : index
    %c0_84 = arith.constant 0 : index
    %c0_85 = arith.constant 0 : index
    %79 = vector.load %arg12[%c0_83, %c0_84, %c0_85] : memref<10x10x8xbf16, #tpu.memory_space<vmem>>, vector<8x8x8xbf16>
    %80 = vector.shape_cast %79 : vector<8x8x8xbf16> to vector<64x8xbf16>
    %c0_86 = arith.constant 0 : index
    %c0_87 = arith.constant 0 : index
    %c0_88 = arith.constant 0 : index
    %81 = vector.load %arg7[%c0_86, %c0_87, %c0_88] : memref<9x8x8xbf16, #tpu.memory_space<vmem>>, vector<1x8x8xbf16>
    %82 = vector.shape_cast %81 : vector<1x8x8xbf16> to vector<8x8xbf16>
    %cst_89 = arith.constant dense<0.000000e+00> : vector<64x8xf32>
    %83 = tpu.matmul %80, %82, %cst_89 {dimension_numbers = #tpu.dot_dimension_numbers<[1], [0], [0], [1], [0, 0, 1, 1], [], []>} : vector<64x8xbf16>, vector<8x8xbf16>, vector<64x8xf32> -> vector<64x8xf32>
    %84 = arith.addf %78, %83 : vector<64x8xf32>
    %c0_90 = arith.constant 0 : index
    %c1_91 = arith.constant 1 : index
    %c0_92 = arith.constant 0 : index
    %85 = vector.load %arg12[%c0_90, %c1_91, %c0_92] : memref<10x10x8xbf16, #tpu.memory_space<vmem>>, vector<8x8x8xbf16>
    %86 = vector.shape_cast %85 : vector<8x8x8xbf16> to vector<64x8xbf16>
    %c1_93 = arith.constant 1 : index
    %c0_94 = arith.constant 0 : index
    %c0_95 = arith.constant 0 : index
    %87 = vector.load %arg7[%c1_93, %c0_94, %c0_95] : memref<9x8x8xbf16, #tpu.memory_space<vmem>>, vector<1x8x8xbf16>
    %88 = vector.shape_cast %87 : vector<1x8x8xbf16> to vector<8x8xbf16>
    %cst_96 = arith.constant dense<0.000000e+00> : vector<64x8xf32>
    %89 = tpu.matmul %86, %88, %cst_96 {dimension_numbers = #tpu.dot_dimension_numbers<[1], [0], [0], [1], [0, 0, 1, 1], [], []>} : vector<64x8xbf16>, vector<8x8xbf16>, vector<64x8xf32> -> vector<64x8xf32>
    %90 = arith.addf %84, %89 : vector<64x8xf32>
    %c0_97 = arith.constant 0 : index
    %c2_98 = arith.constant 2 : index
    %c0_99 = arith.constant 0 : index
    %91 = vector.load %arg12[%c0_97, %c2_98, %c0_99] : memref<10x10x8xbf16, #tpu.memory_space<vmem>>, vector<8x8x8xbf16>
    %92 = vector.shape_cast %91 : vector<8x8x8xbf16> to vector<64x8xbf16>
    %c2_100 = arith.constant 2 : index
    %c0_101 = arith.constant 0 : index
    %c0_102 = arith.constant 0 : index
    %93 = vector.load %arg7[%c2_100, %c0_101, %c0_102] : memref<9x8x8xbf16, #tpu.memory_space<vmem>>, vector<1x8x8xbf16>
    %94 = vector.shape_cast %93 : vector<1x8x8xbf16> to vector<8x8xbf16>
    %cst_103 = arith.constant dense<0.000000e+00> : vector<64x8xf32>
    %95 = tpu.matmul %92, %94, %cst_103 {dimension_numbers = #tpu.dot_dimension_numbers<[1], [0], [0], [1], [0, 0, 1, 1], [], []>} : vector<64x8xbf16>, vector<8x8xbf16>, vector<64x8xf32> -> vector<64x8xf32>
    %96 = arith.addf %90, %95 : vector<64x8xf32>
    %c1_104 = arith.constant 1 : index
    %c0_105 = arith.constant 0 : index
    %c0_106 = arith.constant 0 : index
    %97 = vector.load %arg12[%c1_104, %c0_105, %c0_106] : memref<10x10x8xbf16, #tpu.memory_space<vmem>>, vector<8x8x8xbf16>
    %98 = vector.shape_cast %97 : vector<8x8x8xbf16> to vector<64x8xbf16>
    %c3_107 = arith.constant 3 : index
    %c0_108 = arith.constant 0 : index
    %c0_109 = arith.constant 0 : index
    %99 = vector.load %arg7[%c3_107, %c0_108, %c0_109] : memref<9x8x8xbf16, #tpu.memory_space<vmem>>, vector<1x8x8xbf16>
    %100 = vector.shape_cast %99 : vector<1x8x8xbf16> to vector<8x8xbf16>
    %cst_110 = arith.constant dense<0.000000e+00> : vector<64x8xf32>
    %101 = tpu.matmul %98, %100, %cst_110 {dimension_numbers = #tpu.dot_dimension_numbers<[1], [0], [0], [1], [0, 0, 1, 1], [], []>} : vector<64x8xbf16>, vector<8x8xbf16>, vector<64x8xf32> -> vector<64x8xf32>
    %102 = arith.addf %96, %101 : vector<64x8xf32>
    %c1_111 = arith.constant 1 : index
    %c1_112 = arith.constant 1 : index
    %c0_113 = arith.constant 0 : index
    %103 = vector.load %arg12[%c1_111, %c1_112, %c0_113] : memref<10x10x8xbf16, #tpu.memory_space<vmem>>, vector<8x8x8xbf16>
    %104 = vector.shape_cast %103 : vector<8x8x8xbf16> to vector<64x8xbf16>
    %c4_114 = arith.constant 4 : index
    %c0_115 = arith.constant 0 : index
    %c0_116 = arith.constant 0 : index
    %105 = vector.load %arg7[%c4_114, %c0_115, %c0_116] : memref<9x8x8xbf16, #tpu.memory_space<vmem>>, vector<1x8x8xbf16>
    %106 = vector.shape_cast %105 : vector<1x8x8xbf16> to vector<8x8xbf16>
    %cst_117 = arith.constant dense<0.000000e+00> : vector<64x8xf32>
    %107 = tpu.matmul %104, %106, %cst_117 {dimension_numbers = #tpu.dot_dimension_numbers<[1], [0], [0], [1], [0, 0, 1, 1], [], []>} : vector<64x8xbf16>, vector<8x8xbf16>, vector<64x8xf32> -> vector<64x8xf32>
    %108 = arith.addf %102, %107 : vector<64x8xf32>
    %c1_118 = arith.constant 1 : index
    %c2_119 = arith.constant 2 : index
    %c0_120 = arith.constant 0 : index
    %109 = vector.load %arg12[%c1_118, %c2_119, %c0_120] : memref<10x10x8xbf16, #tpu.memory_space<vmem>>, vector<8x8x8xbf16>
    %110 = vector.shape_cast %109 : vector<8x8x8xbf16> to vector<64x8xbf16>
    %c5_121 = arith.constant 5 : index
    %c0_122 = arith.constant 0 : index
    %c0_123 = arith.constant 0 : index
    %111 = vector.load %arg7[%c5_121, %c0_122, %c0_123] : memref<9x8x8xbf16, #tpu.memory_space<vmem>>, vector<1x8x8xbf16>
    %112 = vector.shape_cast %111 : vector<1x8x8xbf16> to vector<8x8xbf16>
    %cst_124 = arith.constant dense<0.000000e+00> : vector<64x8xf32>
    %113 = tpu.matmul %110, %112, %cst_124 {dimension_numbers = #tpu.dot_dimension_numbers<[1], [0], [0], [1], [0, 0, 1, 1], [], []>} : vector<64x8xbf16>, vector<8x8xbf16>, vector<64x8xf32> -> vector<64x8xf32>
    %114 = arith.addf %108, %113 : vector<64x8xf32>
    %c2_125 = arith.constant 2 : index
    %c0_126 = arith.constant 0 : index
    %c0_127 = arith.constant 0 : index
    %115 = vector.load %arg12[%c2_125, %c0_126, %c0_127] : memref<10x10x8xbf16, #tpu.memory_space<vmem>>, vector<8x8x8xbf16>
    %116 = vector.shape_cast %115 : vector<8x8x8xbf16> to vector<64x8xbf16>
    %c6_128 = arith.constant 6 : index
    %c0_129 = arith.constant 0 : index
    %c0_130 = arith.constant 0 : index
    %117 = vector.load %arg7[%c6_128, %c0_129, %c0_130] : memref<9x8x8xbf16, #tpu.memory_space<vmem>>, vector<1x8x8xbf16>
    %118 = vector.shape_cast %117 : vector<1x8x8xbf16> to vector<8x8xbf16>
    %cst_131 = arith.constant dense<0.000000e+00> : vector<64x8xf32>
    %119 = tpu.matmul %116, %118, %cst_131 {dimension_numbers = #tpu.dot_dimension_numbers<[1], [0], [0], [1], [0, 0, 1, 1], [], []>} : vector<64x8xbf16>, vector<8x8xbf16>, vector<64x8xf32> -> vector<64x8xf32>
    %120 = arith.addf %114, %119 : vector<64x8xf32>
    %c2_132 = arith.constant 2 : index
    %c1_133 = arith.constant 1 : index
    %c0_134 = arith.constant 0 : index
    %121 = vector.load %arg12[%c2_132, %c1_133, %c0_134] : memref<10x10x8xbf16, #tpu.memory_space<vmem>>, vector<8x8x8xbf16>
    %122 = vector.shape_cast %121 : vector<8x8x8xbf16> to vector<64x8xbf16>
    %c7_135 = arith.constant 7 : index
    %c0_136 = arith.constant 0 : index
    %c0_137 = arith.constant 0 : index
    %123 = vector.load %arg7[%c7_135, %c0_136, %c0_137] : memref<9x8x8xbf16, #tpu.memory_space<vmem>>, vector<1x8x8xbf16>
    %124 = vector.shape_cast %123 : vector<1x8x8xbf16> to vector<8x8xbf16>
    %cst_138 = arith.constant dense<0.000000e+00> : vector<64x8xf32>
    %125 = tpu.matmul %122, %124, %cst_138 {dimension_numbers = #tpu.dot_dimension_numbers<[1], [0], [0], [1], [0, 0, 1, 1], [], []>} : vector<64x8xbf16>, vector<8x8xbf16>, vector<64x8xf32> -> vector<64x8xf32>
    %126 = arith.addf %120, %125 : vector<64x8xf32>
    %c2_139 = arith.constant 2 : index
    %c2_140 = arith.constant 2 : index
    %c0_141 = arith.constant 0 : index
    %127 = vector.load %arg12[%c2_139, %c2_140, %c0_141] : memref<10x10x8xbf16, #tpu.memory_space<vmem>>, vector<8x8x8xbf16>
    %128 = vector.shape_cast %127 : vector<8x8x8xbf16> to vector<64x8xbf16>
    %c8_142 = arith.constant 8 : index
    %c0_143 = arith.constant 0 : index
    %c0_144 = arith.constant 0 : index
    %129 = vector.load %arg7[%c8_142, %c0_143, %c0_144] : memref<9x8x8xbf16, #tpu.memory_space<vmem>>, vector<1x8x8xbf16>
    %130 = vector.shape_cast %129 : vector<1x8x8xbf16> to vector<8x8xbf16>
    %cst_145 = arith.constant dense<0.000000e+00> : vector<64x8xf32>
    %131 = tpu.matmul %128, %130, %cst_145 {dimension_numbers = #tpu.dot_dimension_numbers<[1], [0], [0], [1], [0, 0, 1, 1], [], []>} : vector<64x8xbf16>, vector<8x8xbf16>, vector<64x8xf32> -> vector<64x8xf32>
    %132 = arith.addf %126, %131 : vector<64x8xf32>
    %c0_146 = arith.constant 0 : index
    %c0_147 = arith.constant 0 : index
    %133 = vector.load %arg8[%c0_146, %c0_147] : memref<1x8xf32, #tpu.memory_space<vmem>>, vector<1x8xf32>
    %134 = vector.broadcast %133 : vector<1x8xf32> to vector<64x8xf32>
    %135 = arith.addf %132, %134 : vector<64x8xf32>
    %c0_148 = arith.constant 0 : index
    %c0_149 = arith.constant 0 : index
    %c0_150 = arith.constant 0 : index
    %c0_151 = arith.constant 0 : index
    %136 = vector.load %arg4[%c0_148, %c0_149, %c0_150, %c0_151] : memref<1x9x9x4xbf16, #tpu.memory_space<vmem>>, vector<1x8x8x4xbf16>
    %137 = vector.shape_cast %136 : vector<1x8x8x4xbf16> to vector<8x8x4xbf16>
    %138 = vector.shape_cast %137 : vector<8x8x4xbf16> to vector<64x4xbf16>
    %c0_152 = arith.constant 0 : index
    %c0_153 = arith.constant 0 : index
    %139 = vector.load %arg9[%c0_152, %c0_153] : memref<4x8xbf16, #tpu.memory_space<vmem>>, vector<4x8xbf16>
    %cst_154 = arith.constant dense<0.000000e+00> : vector<64x8xf32>
    %140 = tpu.matmul %138, %139, %cst_154 {dimension_numbers = #tpu.dot_dimension_numbers<[1], [0], [0], [1], [0, 0, 1, 1], [], []>} : vector<64x4xbf16>, vector<4x8xbf16>, vector<64x8xf32> -> vector<64x8xf32>
    %c0_155 = arith.constant 0 : index
    %c0_156 = arith.constant 0 : index
    %141 = vector.load %arg10[%c0_155, %c0_156] : memref<1x8xf32, #tpu.memory_space<vmem>>, vector<1x8xf32>
    %142 = vector.broadcast %141 : vector<1x8xf32> to vector<64x8xf32>
    %143 = arith.addf %140, %142 : vector<64x8xf32>
    %144 = arith.addf %135, %143 : vector<64x8xf32>
    %cst_157 = arith.constant 0.000000e+00 : f32
    %145 = vector.broadcast %cst_157 : f32 to vector<64x8xf32>
    %146 = arith.maximumf %144, %145 : vector<64x8xf32>
    %c0_158 = arith.constant 0 : index
    %c0_159 = arith.constant 0 : index
    %c0_160 = arith.constant 0 : index
    %147 = vector.load %arg11[%c0_158, %c0_159, %c0_160] : memref<1x64x8xf32, #tpu.memory_space<vmem>>, vector<1x64x8xf32>
    %148 = vector.shape_cast %147 : vector<1x64x8xf32> to vector<64x8xf32>
    %149 = vector.shape_cast %146 : vector<64x8xf32> to vector<1x64x8xf32>
    tpu.vector_store %arg11[%c0_158, %c0_159, %c0_160], %149 {strides = array<i32>} : memref<1x64x8xf32, #tpu.memory_space<vmem>>, vector<1x64x8xf32>,
    return
  }
  func.func @transform_0(%arg0: i32) -> (i32, i32, i32, i32) {
    %c0_i32 = arith.constant 0 : i32
    %c0_i32_0 = arith.constant 0 : i32
    %c0_i32_1 = arith.constant 0 : i32
    %c0_i32_2 = arith.constant 0 : i32
    return %arg0, %c0_i32, %c0_i32_0, %c0_i32_1 : i32, i32, i32, i32
  }
  func.func @transform_1(%arg0: i32) -> (i32, i32, i32, i32) {
    %c0_i32 = arith.constant 0 : i32
    %c0_i32_0 = arith.constant 0 : i32
    %c0_i32_1 = arith.constant 0 : i32
    %c0_i32_2 = arith.constant 0 : i32
    return %arg0, %c0_i32, %c0_i32_0, %c0_i32_1 : i32, i32, i32, i32
  }
  func.func @transform_2(%arg0: i32) -> (i32, i32, i32, i32) {
    %c0_i32 = arith.constant 0 : i32
    %c0_i32_0 = arith.constant 0 : i32
    %c0_i32_1 = arith.constant 0 : i32
    %c0_i32_2 = arith.constant 0 : i32
    return %arg0, %c0_i32, %c0_i32_0, %c0_i32_1 : i32, i32, i32, i32
  }
  func.func @transform_3(%arg0: i32) -> (i32, i32, i32, i32) {
    %c0_i32 = arith.constant 0 : i32
    %c0_i32_0 = arith.constant 0 : i32
    %c0_i32_1 = arith.constant 0 : i32
    %c0_i32_2 = arith.constant 0 : i32
    return %arg0, %c0_i32, %c0_i32_0, %c0_i32_1 : i32, i32, i32, i32
  }
  func.func @transform_4(%arg0: i32) -> (i32, i32, i32) {
    %c0_i32 = arith.constant 0 : i32
    %c0_i32_0 = arith.constant 0 : i32
    %c0_i32_1 = arith.constant 0 : i32
    %c0_i32_2 = arith.constant 0 : i32
    return %c0_i32, %c0_i32_0, %c0_i32_1 : i32, i32, i32
  }
  func.func @transform_5(%arg0: i32) -> (i32, i32) {
    %c0_i32 = arith.constant 0 : i32
    %c0_i32_0 = arith.constant 0 : i32
    %c0_i32_1 = arith.constant 0 : i32
    return %c0_i32, %c0_i32_0 : i32, i32
  }
  func.func @transform_6(%arg0: i32) -> (i32, i32, i32) {
    %c0_i32 = arith.constant 0 : i32
    %c0_i32_0 = arith.constant 0 : i32
    %c0_i32_1 = arith.constant 0 : i32
    %c0_i32_2 = arith.constant 0 : i32
    return %c0_i32, %c0_i32_0, %c0_i32_1 : i32, i32, i32
  }
  func.func @transform_7(%arg0: i32) -> (i32, i32) {
    %c0_i32 = arith.constant 0 : i32
    %c0_i32_0 = arith.constant 0 : i32
    %c0_i32_1 = arith.constant 0 : i32
    return %c0_i32, %c0_i32_0 : i32, i32
  }
  func.func @transform_8(%arg0: i32) -> (i32, i32) {
    %c0_i32 = arith.constant 0 : i32
    %c0_i32_0 = arith.constant 0 : i32
    %c0_i32_1 = arith.constant 0 : i32
    return %c0_i32, %c0_i32_0 : i32, i32
  }
  func.func @transform_9(%arg0: i32) -> (i32, i32) {
    %c0_i32 = arith.constant 0 : i32
    %c0_i32_0 = arith.constant 0 : i32
    %c0_i32_1 = arith.constant 0 : i32
    return %c0_i32, %c0_i32_0 : i32, i32
  }
  func.func @transform_10(%arg0: i32) -> (i32, i32, i32) {
    %c0_i32 = arith.constant 0 : i32
    %c0_i32_0 = arith.constant 0 : i32
    %c0_i32_1 = arith.constant 0 : i32
    return %arg0, %c0_i32, %c0_i32_0 : i32, i32, i32
  }
}

</mosaic_0001>

<llo_original>
// kernel: tpu_custom_call.1
$region0: #{tpu_custom_call.1}
  #allocation0 [shape = 'u32[]', space=smem, size = 0x4, offset = 0x4, fixed_abs, tag = 'smem constant byte address 0x4 - core index']
  #allocation1 [shape = 'u32[72,128]{1,0:T(1,128)}', space=vmem, size = 0x9000, scoped, tag = 'internal scratch']
  #allocation2 [shape = 'bf16[10,10,8]{2,1,0:T(8,128)(2,1)}', space=vmem, size = 0xa000, scoped, tag = 'scratch operand']
  %s0 = inlined_call_operand.vmem [shape: bf16[2,9,9,4], index: 0, kind: input, shape index: {}]
  %s1 = inlined_call_operand.vmem [shape: bf16[2,9,9,4], index: 1, kind: input, shape index: {}]
  %s2 = inlined_call_operand.vmem [shape: bf16[2,9,9,4], index: 2, kind: input, shape index: {}]
  %s3 = inlined_call_operand.vmem [shape: bf16[2,9,9,4], index: 3, kind: input, shape index: {}]
  %s4 = inlined_call_operand.vmem [shape: bf16[9,4,8], index: 4, kind: input, shape index: {}]
  %s5 = inlined_call_operand.vmem [shape: f32[1,8], index: 5, kind: input, shape index: {}]
  %s6 = inlined_call_operand.vmem [shape: bf16[9,8,8], index: 6, kind: input, shape index: {}]
  %s7 = inlined_call_operand.vmem [shape: f32[1,8], index: 7, kind: input, shape index: {}]
  %s8 = inlined_call_operand.vmem [shape: bf16[4,8], index: 8, kind: input, shape index: {}]
  %s9 = inlined_call_operand.vmem [shape: f32[1,8], index: 9, kind: input, shape index: {}]
  %s10 = inlined_call_operand.vmem [shape: f32[2,64,8], index: 10, kind: output, shape index: {}]
  %s11 = sld [smem:[#allocation0]]
  $region73: #{tpu_custom_call.1} parent=0
    _
  %s13 = ssub.s32 1, %s11
  %s14 = scalar_select 0, %s13, %s11
  loop: start=0, step=1, limit=4
  $region2: #{tpu_custom_call.1} parent=0 // loop_pre_header
    _
  $region3: #{tpu_custom_call.1} parent=0 // loop_header
    %s16 = sphi 0, %s20
    %p17 = scmp.ge.s32.totalorder %s16, 4
    %s26 = sphi 0, %s28
    %s29 = sphi 0, %s26
    %s30 = sphi 0, %s29
    %s46 = sphi 0, %s30
    %s52 = sphi 0, %s54
    %s55 = sphi 0, %s52
    %s56 = sphi 0, %s55
    %s72 = sphi 0, %s56
    %s78 = sphi 0, %s80
    %s81 = sphi 0, %s78
    %s82 = sphi 0, %s81
    %s98 = sphi 0, %s82
    %s104 = sphi 0, %s106
    %s107 = sphi 0, %s104
    %s108 = sphi 0, %s107
    %s124 = sphi 0, %s108
    %s128 = sphi 0, %s128
    %s130 = sphi 0, %s128
    %s131 = sphi 0, %s130
    %s145 = sphi 0, %s131
    %s149 = sphi 0, %s149
    %s151 = sphi 0, %s149
    %s152 = sphi 0, %s151
    %s166 = sphi 0, %s152
    %s170 = sphi 0, %s170
    %s172 = sphi 0, %s170
    %s173 = sphi 0, %s172
    %s187 = sphi 0, %s173
    %s191 = sphi 0, %s191
    %s193 = sphi 0, %s191
    %s194 = sphi 0, %s193
    %s208 = sphi 0, %s194
    %s212 = sphi 0, %s212
    %s214 = sphi 0, %s212
    %s215 = sphi 0, %s214
    %s229 = sphi 0, %s215
    %s233 = sphi 0, %s233
    %s235 = sphi 0, %s233
    %s236 = sphi 0, %s235
    %s250 = sphi 0, %s236
    %s256 = sphi 0, %s258
    %s259 = sphi 0, %s256
    %s260 = sphi 0, %s259
    %s276 = sphi 0, %s260
  $region4: #{tpu_custom_call.1} parent=0 // loop_header_branch
    %19 = sbr.rel (%p17) target = $region8
  $region5: #{tpu_custom_call.1} parent=0 // loop_body
    %s21 = ssub.s32 %s16, 1
    %s22 = ssub.s32 %s16, 2
    %s23 = sadd.s32 %s16, 1
    %s24 = ssub.s32 %s16, %s23
    %p25 = scmp.eq.s32.totalorder %s24, 0
    %s27 = sadd.s32 %s26, 1
    %s28 = scalar_select %p25, %s26, %s27
    %p31 = pneg %p25
    %p32 = scmp.eq.s32.totalorder %s16, 1
    %p33 = por %p31, %p32
    %p34 = scmp.ne.s32.totalorder %s26, %s29
    %p35 = scmp.eq.s32.totalorder %s16, 0
    %p36 = por %p34, %p35
    %p37 = scmp.ne.s32.totalorder %s26, %s29
    %p38 = scmp.eq.s32.totalorder %s21, 1
    %p39 = por %p37, %p38
    %p40 = scmp.ne.s32.totalorder %s29, %s30
    %p41 = scmp.eq.s32.totalorder %s21, 0
    %p42 = por %p40, %p41
    %p43 = scmp.ne.s32.totalorder %s29, %s30
    %p44 = scmp.eq.s32.totalorder %s22, 1
    %p45 = por %p43, %p44
    %p47 = scmp.ne.s32.totalorder %s30, %s46
    %p48 = scmp.eq.s32.totalorder %s22, 0
    %p49 = por %p47, %p48
    %s50 = ssub.s32 %s16, %s23
    %p51 = scmp.eq.s32.totalorder %s50, 0
    %s53 = sadd.s32 %s52, 1
    %s54 = scalar_select %p51, %s52, %s53
    %p57 = pneg %p51
    %p58 = scmp.eq.s32.totalorder %s16, 1
    %p59 = por %p57, %p58
    %p60 = scmp.ne.s32.totalorder %s52, %s55
    %p61 = scmp.eq.s32.totalorder %s16, 0
    %p62 = por %p60, %p61
    %p63 = scmp.ne.s32.totalorder %s52, %s55
    %p64 = scmp.eq.s32.totalorder %s21, 1
    %p65 = por %p63, %p64
    %p66 = scmp.ne.s32.totalorder %s55, %s56
    %p67 = scmp.eq.s32.totalorder %s21, 0
    %p68 = por %p66, %p67
    %p69 = scmp.ne.s32.totalorder %s55, %s56
    %p70 = scmp.eq.s32.totalorder %s22, 1
    %p71 = por %p69, %p70
    %p73 = scmp.ne.s32.totalorder %s56, %s72
    %p74 = scmp.eq.s32.totalorder %s22, 0
    %p75 = por %p73, %p74
    %s76 = ssub.s32 %s16, %s23
    %p77 = scmp.eq.s32.totalorder %s76, 0
    %s79 = sadd.s32 %s78, 1
    %s80 = scalar_select %p77, %s78, %s79
    %p83 = pneg %p77
    %p84 = scmp.eq.s32.totalorder %s16, 1
    %p85 = por %p83, %p84
    %p86 = scmp.ne.s32.totalorder %s78, %s81
    %p87 = scmp.eq.s32.totalorder %s16, 0
    %p88 = por %p86, %p87
    %p89 = scmp.ne.s32.totalorder %s78, %s81
    %p90 = scmp.eq.s32.totalorder %s21, 1
    %p91 = por %p89, %p90
    %p92 = scmp.ne.s32.totalorder %s81, %s82
    %p93 = scmp.eq.s32.totalorder %s21, 0
    %p94 = por %p92, %p93
    %p95 = scmp.ne.s32.totalorder %s81, %s82
    %p96 = scmp.eq.s32.totalorder %s22, 1
    %p97 = por %p95, %p96
    %p99 = scmp.ne.s32.totalorder %s82, %s98
    %p100 = scmp.eq.s32.totalorder %s22, 0
    %p101 = por %p99, %p100
    %s102 = ssub.s32 %s16, %s23
    %p103 = scmp.eq.s32.totalorder %s102, 0
    %s105 = sadd.s32 %s104, 1
    %s106 = scalar_select %p103, %s104, %s105
    %p109 = pneg %p103
    %p110 = scmp.eq.s32.totalorder %s16, 1
    %p111 = por %p109, %p110
    %p112 = scmp.ne.s32.totalorder %s104, %s107
    %p113 = scmp.eq.s32.totalorder %s16, 0
    %p114 = por %p112, %p113
    %p115 = scmp.ne.s32.totalorder %s104, %s107
    %p116 = scmp.eq.s32.totalorder %s21, 1
    %p117 = por %p115, %p116
    %p118 = scmp.ne.s32.totalorder %s107, %s108
    %p119 = scmp.eq.s32.totalorder %s21, 0
    %p120 = por %p118, %p119
    %p121 = scmp.ne.s32.totalorder %s107, %s108
    %p122 = scmp.eq.s32.totalorder %s22, 1
    %p123 = por %p121, %p122
    %p125 = scmp.ne.s32.totalorder %s108, %s124
    %p126 = scmp.eq.s32.totalorder %s22, 0
    %p127 = por %p125, %p126
    %s129 = sadd.s32 %s128, 1
    %p132 = scmp.eq.s32.totalorder %s16, 1
    %p133 = scmp.ne.s32.totalorder %s128, %s130
    %p134 = scmp.eq.s32.totalorder %s16, 0
    %p135 = por %p133, %p134
    %p136 = scmp.ne.s32.totalorder %s128, %s130
    %p137 = scmp.eq.s32.totalorder %s21, 1
    %p138 = por %p136, %p137
    %p139 = scmp.ne.s32.totalorder %s130, %s131
    %p140 = scmp.eq.s32.totalorder %s21, 0
    %p141 = por %p139, %p140
    %p142 = scmp.ne.s32.totalorder %s130, %s131
    %p143 = scmp.eq.s32.totalorder %s22, 1
    %p144 = por %p142, %p143
    %p146 = scmp.ne.s32.totalorder %s131, %s145
    %p147 = scmp.eq.s32.totalorder %s22, 0
    %p148 = por %p146, %p147
    %s150 = sadd.s32 %s149, 1
    %p153 = scmp.eq.s32.totalorder %s16, 1
    %p154 = scmp.ne.s32.totalorder %s149, %s151
    %p155 = scmp.eq.s32.totalorder %s16, 0
    %p156 = por %p154, %p155
    %p157 = scmp.ne.s32.totalorder %s149, %s151
    %p158 = scmp.eq.s32.totalorder %s21, 1
    %p159 = por %p157, %p158
    %p160 = scmp.ne.s32.totalorder %s151, %s152
    %p161 = scmp.eq.s32.totalorder %s21, 0
    %p162 = por %p160, %p161
    %p163 = scmp.ne.s32.totalorder %s151, %s152
    %p164 = scmp.eq.s32.totalorder %s22, 1
    %p165 = por %p163, %p164
    %p167 = scmp.ne.s32.totalorder %s152, %s166
    %p168 = scmp.eq.s32.totalorder %s22, 0
    %p169 = por %p167, %p168
    %s171 = sadd.s32 %s170, 1
    %p174 = scmp.eq.s32.totalorder %s16, 1
    %p175 = scmp.ne.s32.totalorder %s170, %s172
    %p176 = scmp.eq.s32.totalorder %s16, 0
    %p177 = por %p175, %p176
    %p178 = scmp.ne.s32.totalorder %s170, %s172
    %p179 = scmp.eq.s32.totalorder %s21, 1
    %p180 = por %p178, %p179
    %p181 = scmp.ne.s32.totalorder %s172, %s173
    %p182 = scmp.eq.s32.totalorder %s21, 0
    %p183 = por %p181, %p182
    %p184 = scmp.ne.s32.totalorder %s172, %s173
    %p185 = scmp.eq.s32.totalorder %s22, 1
    %p186 = por %p184, %p185
    %p188 = scmp.ne.s32.totalorder %s173, %s187
    %p189 = scmp.eq.s32.totalorder %s22, 0
    %p190 = por %p188, %p189
    %s192 = sadd.s32 %s191, 1
    %p195 = scmp.eq.s32.totalorder %s16, 1
    %p196 = scmp.ne.s32.totalorder %s191, %s193
    %p197 = scmp.eq.s32.totalorder %s16, 0
    %p198 = por %p196, %p197
    %p199 = scmp.ne.s32.totalorder %s191, %s193
    %p200 = scmp.eq.s32.totalorder %s21, 1
    %p201 = por %p199, %p200
    %p202 = scmp.ne.s32.totalorder %s193, %s194
    %p203 = scmp.eq.s32.totalorder %s21, 0
    %p204 = por %p202, %p203
    %p205 = scmp.ne.s32.totalorder %s193, %s194
    %p206 = scmp.eq.s32.totalorder %s22, 1
    %p207 = por %p205, %p206
    %p209 = scmp.ne.s32.totalorder %s194, %s208
    %p210 = scmp.eq.s32.totalorder %s22, 0
    %p211 = por %p209, %p210
    %s213 = sadd.s32 %s212, 1
    %p216 = scmp.eq.s32.totalorder %s16, 1
    %p217 = scmp.ne.s32.totalorder %s212, %s214
    %p218 = scmp.eq.s32.totalorder %s16, 0
    %p219 = por %p217, %p218
    %p220 = scmp.ne.s32.totalorder %s212, %s214
    %p221 = scmp.eq.s32.totalorder %s21, 1
    %p222 = por %p220, %p221
    %p223 = scmp.ne.s32.totalorder %s214, %s215
    %p224 = scmp.eq.s32.totalorder %s21, 0
    %p225 = por %p223, %p224
    %p226 = scmp.ne.s32.totalorder %s214, %s215
    %p227 = scmp.eq.s32.totalorder %s22, 1
    %p228 = por %p226, %p227
    %p230 = scmp.ne.s32.totalorder %s215, %s229
    %p231 = scmp.eq.s32.totalorder %s22, 0
    %p232 = por %p230, %p231
    %s234 = sadd.s32 %s233, 1
    %p237 = scmp.eq.s32.totalorder %s16, 1
    %p238 = scmp.ne.s32.totalorder %s233, %s235
    %p239 = scmp.eq.s32.totalorder %s16, 0
    %p240 = por %p238, %p239
    %p241 = scmp.ne.s32.totalorder %s233, %s235
    %p242 = scmp.eq.s32.totalorder %s21, 1
    %p243 = por %p241, %p242
    %p244 = scmp.ne.s32.totalorder %s235, %s236
    %p245 = scmp.eq.s32.totalorder %s21, 0
    %p246 = por %p244, %p245
    %p247 = scmp.ne.s32.totalorder %s235, %s236
    %p248 = scmp.eq.s32.totalorder %s22, 1
    %p249 = por %p247, %p248
    %p251 = scmp.ne.s32.totalorder %s236, %s250
    %p252 = scmp.eq.s32.totalorder %s22, 0
    %p253 = por %p251, %p252
    %s254 = ssub.s32 %s16, %s23
    %p255 = scmp.eq.s32.totalorder %s254, 0
    %s257 = sadd.s32 %s256, 1
    %s258 = scalar_select %p255, %s256, %s257
    %p261 = pneg %p255
    %p262 = scmp.eq.s32.totalorder %s16, 1
    %p263 = por %p261, %p262
    %p264 = scmp.ne.s32.totalorder %s256, %s259
    %p265 = scmp.eq.s32.totalorder %s16, 0
    %p266 = por %p264, %p265
    %p267 = scmp.ne.s32.totalorder %s256, %s259
    %p268 = scmp.eq.s32.totalorder %s21, 1
    %p269 = por %p267, %p268
    %p270 = scmp.ne.s32.totalorder %s259, %s260
    %p271 = scmp.eq.s32.totalorder %s21, 0
    %p272 = por %p270, %p271
    %p273 = scmp.ne.s32.totalorder %s259, %s260
    %p274 = scmp.eq.s32.totalorder %s22, 1
    %p275 = por %p273, %p274
    %p277 = scmp.ne.s32.totalorder %s260, %s276
    %p278 = scmp.eq.s32.totalorder %s22, 0
    %p279 = por %p277, %p278
    %p280 = scmp.le.s32.totalorder 1, %s16
    %p281 = scmp.lt.s32.totalorder %s16, 3
    %p282 = pnand %p280, %p281
    %p283 = pneg %p282
    // Predicated region
    $region9: #{tpu_custom_call.1} parent=5 // pred_check
      _
    $region10: #{tpu_custom_call.1} parent=5 // pred_check_branch
      %285 = sbr.rel (%p282) target = $region12
    $region11: #{tpu_custom_call.1} parent=5 // pred_region
      %s286 = ssub.s32 %s16, 1
      // Predicated region
      $region13: #{tpu_custom_call.1} parent=11 // pred_check
        %p287 = pneg %p141
      $region14: #{tpu_custom_call.1} parent=11 // pred_check_branch
        %289 = sbr.rel (%p287) target = $region16
      $region15: #{tpu_custom_call.1} parent=11 // pred_region
        _
      $region16: #{tpu_custom_call.1} parent=11 // pred_fallthru
        _
      // Predicated region
      $region17: #{tpu_custom_call.1} parent=11 // pred_check
        %p290 = pneg %p162
      $region18: #{tpu_custom_call.1} parent=11 // pred_check_branch
        %292 = sbr.rel (%p290) target = $region20
      $region19: #{tpu_custom_call.1} parent=11 // pred_region
        _
      $region20: #{tpu_custom_call.1} parent=11 // pred_fallthru
        _
      // Predicated region
      $region21: #{tpu_custom_call.1} parent=11 // pred_check
        %p293 = pneg %p183
      $region22: #{tpu_custom_call.1} parent=11 // pred_check_branch
        %295 = sbr.rel (%p293) target = $region24
      $region23: #{tpu_custom_call.1} parent=11 // pred_region
        _
      $region24: #{tpu_custom_call.1} parent=11 // pred_fallthru
        _
      // Predicated region
      $region25: #{tpu_custom_call.1} parent=11 // pred_check
        %p296 = pneg %p204
      $region26: #{tpu_custom_call.1} parent=11 // pred_check_branch
        %298 = sbr.rel (%p296) target = $region28
      $region27: #{tpu_custom_call.1} parent=11 // pred_region
        _
      $region28: #{tpu_custom_call.1} parent=11 // pred_fallthru
        _
      // Predicated region
      $region29: #{tpu_custom_call.1} parent=11 // pred_check
        %p299 = pneg %p225
      $region30: #{tpu_custom_call.1} parent=11 // pred_check_branch
        %301 = sbr.rel (%p299) target = $region32
      $region31: #{tpu_custom_call.1} parent=11 // pred_region
        _
      $region32: #{tpu_custom_call.1} parent=11 // pred_fallthru
        _
      // Predicated region
      $region33: #{tpu_custom_call.1} parent=11 // pred_check
        %p302 = pneg %p246
      $region34: #{tpu_custom_call.1} parent=11 // pred_check_branch
        %304 = sbr.rel (%p302) target = $region36
      $region35: #{tpu_custom_call.1} parent=11 // pred_region
        _
      $region36: #{tpu_custom_call.1} parent=11 // pred_fallthru
        _
    $region12: #{tpu_custom_call.1} parent=5 // pred_fallthru
      _
    %p305 = scmp.lt.s32.totalorder %s16, 2
    // Predicated region
    $region37: #{tpu_custom_call.1} parent=5 // pred_check
      %p306 = pneg %p305
    $region38: #{tpu_custom_call.1} parent=5 // pred_check_branch
      %308 = sbr.rel (%p306) target = $region40
    $region39: #{tpu_custom_call.1} parent=5 // pred_region
      // Predicated region
      $region41: #{tpu_custom_call.1} parent=39 // pred_check
        %p309 = pneg %p36
      $region42: #{tpu_custom_call.1} parent=39 // pred_check_branch
        %311 = sbr.rel (%p309) target = $region44
      $region43: #{tpu_custom_call.1} parent=39 // pred_region
        %p312 = scmp.lt.s32.totalorder %s16, 1
        %s313 = scalar_select %p312, %s16, 1
        %s314 = smul.addr %s313, 18
        %s315 = smul.addr %s314, 4
        %s316 = scalar_lea.vmem %s0, %s315
      $region44: #{tpu_custom_call.1} parent=39 // pred_fallthru
        _
      // Predicated region
      $region45: #{tpu_custom_call.1} parent=39 // pred_check
        %p317 = pneg %p62
      $region46: #{tpu_custom_call.1} parent=39 // pred_check_branch
        %319 = sbr.rel (%p317) target = $region48
      $region47: #{tpu_custom_call.1} parent=39 // pred_region
        %p320 = scmp.lt.s32.totalorder %s16, 1
        %s321 = scalar_select %p320, %s16, 1
        %s322 = smul.addr %s321, 18
        %s323 = smul.addr %s322, 4
        %s324 = scalar_lea.vmem %s1, %s323
      $region48: #{tpu_custom_call.1} parent=39 // pred_fallthru
        _
      // Predicated region
      $region49: #{tpu_custom_call.1} parent=39 // pred_check
        %p325 = pneg %p88
      $region50: #{tpu_custom_call.1} parent=39 // pred_check_branch
        %327 = sbr.rel (%p325) target = $region52
      $region51: #{tpu_custom_call.1} parent=39 // pred_region
        %p328 = scmp.lt.s32.totalorder %s16, 1
        %s329 = scalar_select %p328, %s16, 1
        %s330 = smul.addr %s329, 18
        %s331 = smul.addr %s330, 4
        %s332 = scalar_lea.vmem %s2, %s331
      $region52: #{tpu_custom_call.1} parent=39 // pred_fallthru
        _
      // Predicated region
      $region53: #{tpu_custom_call.1} parent=39 // pred_check
        %p333 = pneg %p114
      $region54: #{tpu_custom_call.1} parent=39 // pred_check_branch
        %335 = sbr.rel (%p333) target = $region56
      $region55: #{tpu_custom_call.1} parent=39 // pred_region
        %p336 = scmp.lt.s32.totalorder %s16, 1
        %s337 = scalar_select %p336, %s16, 1
        %s338 = smul.addr %s337, 18
        %s339 = smul.addr %s338, 4
        %s340 = scalar_lea.vmem %s3, %s339
      $region56: #{tpu_custom_call.1} parent=39 // pred_fallthru
        _
    $region40: #{tpu_custom_call.1} parent=5 // pred_fallthru
      _
    %p341 = scmp.le.s32.totalorder 1, %s16
    %p342 = scmp.lt.s32.totalorder %s16, 3
    %p343 = pnand %p341, %p342
    %p344 = pneg %p343
    // Predicated region
    $region57: #{tpu_custom_call.1} parent=5 // pred_check
      _
    $region58: #{tpu_custom_call.1} parent=5 // pred_check_branch
      %346 = sbr.rel (%p343) target = $region60
    $region59: #{tpu_custom_call.1} parent=5 // pred_region
      %s347 = ssub.s32 %s16, 1
      %p348 = scmp.lt.s32.totalorder %s21, 1
      %s349 = scalar_select %p348, %s21, 1
      %s350 = smul.addr %s349, 18
      %s351 = smul.addr %s350, 4
      %s352 = scalar_lea.vmem %s0, %s351
      %p353 = pneg %p42
      %p354 = pneg %p39
      %p355 = scmp.lt.s32.totalorder %s21, 1
      %s356 = scalar_select %p355, %s21, 1
      %s357 = smul.addr %s356, 18
      %s358 = smul.addr %s357, 4
      %s359 = scalar_lea.vmem %s1, %s358
      %p360 = pneg %p68
      %p361 = pneg %p65
      %p362 = scmp.lt.s32.totalorder %s21, 1
      %s363 = scalar_select %p362, %s21, 1
      %s364 = smul.addr %s363, 18
      %s365 = smul.addr %s364, 4
      %s366 = scalar_lea.vmem %s2, %s365
      %p367 = pneg %p94
      %p368 = pneg %p91
      %p369 = scmp.lt.s32.totalorder %s21, 1
      %s370 = scalar_select %p369, %s21, 1
      %s371 = smul.addr %s370, 18
      %s372 = smul.addr %s371, 4
      %s373 = scalar_lea.vmem %s3, %s372
      %p374 = pneg %p120
      %p375 = pneg %p117
      %p376 = pneg %p141
      %p377 = pneg %p138
      %p378 = pneg %p162
      %p379 = pneg %p159
      %p380 = pneg %p183
      %p381 = pneg %p180
      %p382 = pneg %p204
      %p383 = pneg %p201
      %p384 = pneg %p225
      %p385 = pneg %p222
      %p386 = pneg %p246
      %p387 = pneg %p243
      %p388 = pneg %p272
      %p389 = pneg %p269
      %p390 = scmp.lt.s32.totalorder %s21, 1
      %s391 = scalar_select %p390, %s21, 1
      %s392 = smul.addr %s391, 8
      %s393 = smul.addr %s392, 8
      %s394 = scalar_lea.vmem %s10, %s393
      %p395 = scmp.lt.s32.totalorder %s21, 1
      %s396 = scalar_select %p395, %s21, 1
      %s397 = smul.addr %s396, 18
      %s398 = smul.addr %s397, 4
      %s399 = scalar_lea.vmem %s0, %s398
      %p400 = scmp.lt.s32.totalorder %s21, 1
      %s401 = scalar_select %p400, %s21, 1
      %s402 = smul.addr %s401, 18
      %s403 = smul.addr %s402, 4
      %s404 = scalar_lea.vmem %s1, %s403
      %p405 = scmp.lt.s32.totalorder %s21, 1
      %s406 = scalar_select %p405, %s21, 1
      %s407 = smul.addr %s406, 18
      %s408 = smul.addr %s407, 4
      %s409 = scalar_lea.vmem %s2, %s408
      %p410 = scmp.lt.s32.totalorder %s21, 1
      %s411 = scalar_select %p410, %s21, 1
      %s412 = smul.addr %s411, 18
      %s413 = smul.addr %s412, 4
      %s414 = scalar_lea.vmem %s3, %s413
      %p415 = scmp.lt.s32.totalorder %s21, 1
      %s416 = scalar_select %p415, %s21, 1
      %s417 = smul.addr %s416, 8
      %s418 = smul.addr %s417, 8
      %s419 = scalar_lea.vmem %s10, %s418
      %v421 = vld [vmem:[%s399] sm:$0xf]
      %v422 = vld [vmem:[%s399 + $0x8] sm:$0xf]
      %v423 = vld [vmem:[%s399 + $0x10] sm:$0xf]
      %v424 = vld [vmem:[%s399 + $0x18] sm:$0xf]
      %v425 = vld [vmem:[%s399 + $0x20] sm:$0xf]
      %v426 = vld [vmem:[%s399 + $0x28] sm:$0xf]
      %v427 = vld [vmem:[%s399 + $0x30] sm:$0xf]
      %v428 = vld [vmem:[%s399 + $0x38] sm:$0xf]
      %v429 = vld [vmem:[%s4] sm:$0x3]
      %v430 = vld [vmem:[%s404] sm:$0xf]
      %v431 = vld [vmem:[%s404 + $0x8] sm:$0xf]
      %v432 = vld [vmem:[%s404 + $0x10] sm:$0xf]
      %v433 = vld [vmem:[%s404 + $0x18] sm:$0xf]
      %v434 = vld [vmem:[%s404 + $0x20] sm:$0xf]
      %v435 = vld [vmem:[%s404 + $0x28] sm:$0xf]
      %v436 = vld [vmem:[%s404 + $0x30] sm:$0xf]
      %v437 = vld [vmem:[%s404 + $0x38] sm:$0xf]
      %s438 = scalar_lea.vmem %s4, 2
      %v439 = vld [vmem:[%s438] sm:$0x3]
      %v448 = vunpack.c.l.b16 %v430
      %v449 = vunpack.c.l.b16 %v431
      %v450 = vunpack.c.l.b16 %v432
      %v451 = vunpack.c.l.b16 %v433
      %v452 = vunpack.c.l.b16 %v434
      %v453 = vunpack.c.l.b16 %v435
      %v454 = vunpack.c.l.b16 %v436
      %v455 = vunpack.c.l.b16 %v437
      %v456 = vpack.c.b16 %v449, %v448
      %v457 = vpack.c.b16 %v451, %v450
      %v458 = vpack.c.b16 %v453, %v452
      %v459 = vpack.c.b16 %v455, %v454
      %vm460 = vcmask 31744
      %v462 = vsel %vm460, %v456, 0
      %v465 = vsel %vm460, %v457, 0
      %v468 = vsel %vm460, %v458, 0
      %v471 = vsel %vm460, %v459, 0
      %vm473 = vcmask 1041408
      %v475 = vsel %vm473, %v439, 0
      %477 = vmatpush.bf16.msra.mxu0 0
      %478 = vmatpush.bf16.msra.mxu0 0
      %479 = vmatpush.bf16.msra.mxu0 0
      %480 = vmatpush.bf16.msra.mxu0 0
      %481 = vmatpush.bf16.msra.mxu0 0
      %482 = vmatpush.bf16.msra.mxu0 0
      %483 = vmatpush.bf16.msra.mxu0 0
      %484 = vmatpush.bf16.msra.mxu0 %v475
      %485 = vmatmul.bf16.gmra.mxu0 %v462
      %v486 = vpop.f32.mrf.mxu0
      %v487 = vadd.f32 0.0, %v486
      %v488 = vpop.f32.mrf.mxu0
      %v489 = vadd.f32 0.0, %v488
      %490 = vmatmul.bf16.gmra.mxu0 %v465
      %v491 = vpop.f32.mrf.mxu0
      %v492 = vadd.f32 0.0, %v491
      %v493 = vpop.f32.mrf.mxu0
      %v494 = vadd.f32 0.0, %v493
      %495 = vmatmul.bf16.gmra.mxu0 %v468
      %v496 = vpop.f32.mrf.mxu0
      %v497 = vadd.f32 0.0, %v496
      %v498 = vpop.f32.mrf.mxu0
      %v499 = vadd.f32 0.0, %v498
      %500 = vmatmul.bf16.gmra.mxu0 %v471
      %v501 = vpop.f32.mrf.mxu0
      %v502 = vadd.f32 0.0, %v501
      %v503 = vpop.f32.mrf.mxu0
      %v504 = vadd.f32 0.0, %v503
      %505 = vdwg.mxu0
      %v514 = vunpack.c.l.b16 %v421
      %v515 = vunpack.c.l.b16 %v422
      %v516 = vunpack.c.l.b16 %v423
      %v517 = vunpack.c.l.b16 %v424
      %v518 = vunpack.c.l.b16 %v425
      %v519 = vunpack.c.l.b16 %v426
      %v520 = vunpack.c.l.b16 %v427
      %v521 = vunpack.c.l.b16 %v428
      %v522 = vpack.c.b16 %v515, %v514
      %v523 = vpack.c.b16 %v517, %v516
      %v524 = vpack.c.b16 %v519, %v518
      %v525 = vpack.c.b16 %v521, %v520
      %v527 = vsel %vm460, %v522, 0
      %v530 = vsel %vm460, %v523, 0
      %v533 = vsel %vm460, %v524, 0
      %v536 = vsel %vm460, %v525, 0
      %v539 = vsel %vm473, %v429, 0
      %541 = vmatpush.bf16.msra.mxu0 0
      %542 = vmatpush.bf16.msra.mxu0 0
      %543 = vmatpush.bf16.msra.mxu0 0
      %544 = vmatpush.bf16.msra.mxu0 0
      %545 = vmatpush.bf16.msra.mxu0 0
      %546 = vmatpush.bf16.msra.mxu0 0
      %547 = vmatpush.bf16.msra.mxu0 0
      %548 = vmatpush.bf16.msra.mxu0 %v539
      %549 = vmatmul.bf16.gmra.mxu0 %v527
      %v550 = vpop.f32.mrf.mxu0
      %v551 = vadd.f32 %v487, %v550
      %v552 = vpop.f32.mrf.mxu0
      %v553 = vadd.f32 %v489, %v552
      %554 = vmatmul.bf16.gmra.mxu0 %v530
      %v555 = vpop.f32.mrf.mxu0
      %v556 = vadd.f32 %v492, %v555
      %v557 = vpop.f32.mrf.mxu0
      %v558 = vadd.f32 %v494, %v557
      %559 = vmatmul.bf16.gmra.mxu0 %v533
      %v560 = vpop.f32.mrf.mxu0
      %v561 = vadd.f32 %v497, %v560
      %v562 = vpop.f32.mrf.mxu0
      %v563 = vadd.f32 %v499, %v562
      %564 = vmatmul.bf16.gmra.mxu0 %v536
      %v565 = vpop.f32.mrf.mxu0
      %v566 = vadd.f32 %v502, %v565
      %v567 = vpop.f32.mrf.mxu0
      %v568 = vadd.f32 %v504, %v567
      %569 = vdwg.mxu0
      %v570 = vld [vmem:[%s399] sm:$0xf]
      %v571 = vld [vmem:[%s399 + $0x4] sm:$0x1]
      %v572 = vld [vmem:[%s399 + $0x8] sm:$0xf]
      %v573 = vld [vmem:[%s399 + $0xc] sm:$0x1]
      %v574 = vld [vmem:[%s399 + $0x10] sm:$0xf]
      %v575 = vld [vmem:[%s399 + $0x14] sm:$0x1]
      %v576 = vld [vmem:[%s399 + $0x18] sm:$0xf]
      %v577 = vld [vmem:[%s399 + $0x1c] sm:$0x1]
      %v578 = vld [vmem:[%s399 + $0x20] sm:$0xf]
      %v579 = vld [vmem:[%s399 + $0x24] sm:$0x1]
      %v580 = vld [vmem:[%s399 + $0x28] sm:$0xf]
      %v581 = vld [vmem:[%s399 + $0x2c] sm:$0x1]
      %v582 = vld [vmem:[%s399 + $0x30] sm:$0xf]
      %v583 = vld [vmem:[%s399 + $0x34] sm:$0x1]
      %v584 = vld [vmem:[%s399 + $0x38] sm:$0xf]
      %v585 = vld [vmem:[%s399 + $0x3c] sm:$0x1]
      %vm586 = vsmask.f32 3328
      %vm587 = vsmask.f32 7440
      %vm588 = vmor %vm586, %vm587
      %v590 = vshrl.u32 %v570, 16
      %v592 = vrot.slane %v590, 4
      %v593 = vshll.u32 %v570, 16
      %v595 = vrot.slane %v593, 5
      %v596 = vor.u32 %v592, %v595
      %v597 = vrot.slane %v596, 4
      %v599 = vshll.u32 %v571, 16
      %v601 = vrot.slane %v599, 5
      %v602 = vsel %vm588, %v597, %v601
      %v604 = vshrl.u32 %v572, 16
      %v606 = vrot.slane %v604, 4
      %v607 = vshll.u32 %v572, 16
      %v609 = vrot.slane %v607, 5
      %v610 = vor.u32 %v606, %v609
      %v611 = vrot.slane %v610, 4
      %v613 = vshll.u32 %v573, 16
      %v615 = vrot.slane %v613, 5
      %v616 = vsel %vm588, %v611, %v615
      %v618 = vshrl.u32 %v574, 16
      %v620 = vrot.slane %v618, 4
      %v621 = vshll.u32 %v574, 16
      %v623 = vrot.slane %v621, 5
      %v624 = vor.u32 %v620, %v623
      %v625 = vrot.slane %v624, 4
      %v627 = vshll.u32 %v575, 16
      %v629 = vrot.slane %v627, 5
      %v630 = vsel %vm588, %v625, %v629
      %v632 = vshrl.u32 %v576, 16
      %v634 = vrot.slane %v632, 4
      %v635 = vshll.u32 %v576, 16
      %v637 = vrot.slane %v635, 5
      %v638 = vor.u32 %v634, %v637
      %v639 = vrot.slane %v638, 4
      %v641 = vshll.u32 %v577, 16
      %v643 = vrot.slane %v641, 5
      %v644 = vsel %vm588, %v639, %v643
      %v646 = vshrl.u32 %v578, 16
      %v648 = vrot.slane %v646, 4
      %v649 = vshll.u32 %v578, 16
      %v651 = vrot.slane %v649, 5
      %v652 = vor.u32 %v648, %v651
      %v653 = vrot.slane %v652, 4
      %v655 = vshll.u32 %v579, 16
      %v657 = vrot.slane %v655, 5
      %v658 = vsel %vm588, %v653, %v657
      %v660 = vshrl.u32 %v580, 16
      %v662 = vrot.slane %v660, 4
      %v663 = vshll.u32 %v580, 16
      %v665 = vrot.slane %v663, 5
      %v666 = vor.u32 %v662, %v665
      %v667 = vrot.slane %v666, 4
      %v669 = vshll.u32 %v581, 16
      %v671 = vrot.slane %v669, 5
      %v672 = vsel %vm588, %v667, %v671
      %v674 = vshrl.u32 %v582, 16
      %v676 = vrot.slane %v674, 4
      %v677 = vshll.u32 %v582, 16
      %v679 = vrot.slane %v677, 5
      %v680 = vor.u32 %v676, %v679
      %v681 = vrot.slane %v680, 4
      %v683 = vshll.u32 %v583, 16
      %v685 = vrot.slane %v683, 5
      %v686 = vsel %vm588, %v681, %v685
      %v688 = vshrl.u32 %v584, 16
      %v690 = vrot.slane %v688, 4
      %v691 = vshll.u32 %v584, 16
      %v693 = vrot.slane %v691, 5
      %v694 = vor.u32 %v690, %v693
      %v695 = vrot.slane %v694, 4
      %v697 = vshll.u32 %v585, 16
      %v699 = vrot.slane %v697, 5
      %v700 = vsel %vm588, %v695, %v699
      %s701 = scalar_lea.vmem %s4, 4
      %v702 = vld [vmem:[%s701] sm:$0x3]
      %v703 = vunpack.c.l.b16 %v602
      %v704 = vunpack.c.l.b16 %v616
      %v705 = vunpack.c.l.b16 %v630
      %v706 = vunpack.c.l.b16 %v644
      %v707 = vunpack.c.l.b16 %v658
      %v708 = vunpack.c.l.b16 %v672
      %v709 = vunpack.c.l.b16 %v686
      %v710 = vunpack.c.l.b16 %v700
      %v711 = vpack.c.b16 %v704, %v703
      %v712 = vpack.c.b16 %v706, %v705
      %v713 = vpack.c.b16 %v708, %v707
      %v714 = vpack.c.b16 %v710, %v709
      %v716 = vsel %vm460, %v711, 0
      %v719 = vsel %vm460, %v712, 0
      %v722 = vsel %vm460, %v713, 0
      %v725 = vsel %vm460, %v714, 0
      %v728 = vsel %vm473, %v702, 0
      %730 = vmatpush.bf16.msra.mxu0 0
      %731 = vmatpush.bf16.msra.mxu0 0
      %732 = vmatpush.bf16.msra.mxu0 0
      %733 = vmatpush.bf16.msra.mxu0 0
      %734 = vmatpush.bf16.msra.mxu0 0
      %735 = vmatpush.bf16.msra.mxu0 0
      %736 = vmatpush.bf16.msra.mxu0 0
      %737 = vmatpush.bf16.msra.mxu0 %v728
      %738 = vmatmul.bf16.gmra.mxu0 %v716
      %v739 = vpop.f32.mrf.mxu0
      %v740 = vadd.f32 0.0, %v739
      %v741 = vpop.f32.mrf.mxu0
      %v742 = vadd.f32 0.0, %v741
      %743 = vmatmul.bf16.gmra.mxu0 %v719
      %v744 = vpop.f32.mrf.mxu0
      %v745 = vadd.f32 0.0, %v744
      %v746 = vpop.f32.mrf.mxu0
      %v747 = vadd.f32 0.0, %v746
      %748 = vmatmul.bf16.gmra.mxu0 %v722
      %v749 = vpop.f32.mrf.mxu0
      %v750 = vadd.f32 0.0, %v749
      %v751 = vpop.f32.mrf.mxu0
      %v752 = vadd.f32 0.0, %v751
      %753 = vmatmul.bf16.gmra.mxu0 %v725
      %v754 = vpop.f32.mrf.mxu0
      %v755 = vadd.f32 0.0, %v754
      %v756 = vpop.f32.mrf.mxu0
      %v757 = vadd.f32 0.0, %v756
      %758 = vdwg.mxu0
      %v759 = vadd.f32 %v551, %v740
      %v760 = vadd.f32 %v553, %v742
      %v761 = vadd.f32 %v556, %v745
      %v762 = vadd.f32 %v558, %v747
      %v763 = vadd.f32 %v561, %v750
      %v764 = vadd.f32 %v563, %v752
      %v765 = vadd.f32 %v566, %v755
      %v766 = vadd.f32 %v568, %v757
      %v767 = vld [vmem:[%s409] sm:$0xf]
      %v768 = vld [vmem:[%s409 + $0x8] sm:$0xf]
      %v769 = vld [vmem:[%s409 + $0x10] sm:$0xf]
      %v770 = vld [vmem:[%s409 + $0x18] sm:$0xf]
      %v771 = vld [vmem:[%s409 + $0x20] sm:$0xf]
      %v772 = vld [vmem:[%s409 + $0x28] sm:$0xf]
      %v773 = vld [vmem:[%s409 + $0x30] sm:$0xf]
      %v774 = vld [vmem:[%s409 + $0x38] sm:$0xf]
      %s775 = scalar_lea.vmem %s4, 6
      %v776 = vld [vmem:[%s775] sm:$0x3]
      %v785 = vunpack.c.l.b16 %v767
      %v786 = vunpack.c.l.b16 %v768
      %v787 = vunpack.c.l.b16 %v769
      %v788 = vunpack.c.l.b16 %v770
      %v789 = vunpack.c.l.b16 %v771
      %v790 = vunpack.c.l.b16 %v772
      %v791 = vunpack.c.l.b16 %v773
      %v792 = vunpack.c.l.b16 %v774
      %v793 = vpack.c.b16 %v786, %v785
      %v794 = vpack.c.b16 %v788, %v787
      %v795 = vpack.c.b16 %v790, %v789
      %v796 = vpack.c.b16 %v792, %v791
      %v798 = vsel %vm460, %v793, 0
      %v801 = vsel %vm460, %v794, 0
      %v804 = vsel %vm460, %v795, 0
      %v807 = vsel %vm460, %v796, 0
      %v810 = vsel %vm473, %v776, 0
      %812 = vmatpush.bf16.msra.mxu0 0
      %813 = vmatpush.bf16.msra.mxu0 0
      %814 = vmatpush.bf16.msra.mxu0 0
      %815 = vmatpush.bf16.msra.mxu0 0
      %816 = vmatpush.bf16.msra.mxu0 0
      %817 = vmatpush.bf16.msra.mxu0 0
      %818 = vmatpush.bf16.msra.mxu0 0
      %819 = vmatpush.bf16.msra.mxu0 %v810
      %820 = vmatmul.bf16.gmra.mxu0 %v798
      %v821 = vpop.f32.mrf.mxu0
      %v822 = vadd.f32 0.0, %v821
      %v823 = vpop.f32.mrf.mxu0
      %v824 = vadd.f32 0.0, %v823
      %825 = vmatmul.bf16.gmra.mxu0 %v801
      %v826 = vpop.f32.mrf.mxu0
      %v827 = vadd.f32 0.0, %v826
      %v828 = vpop.f32.mrf.mxu0
      %v829 = vadd.f32 0.0, %v828
      %830 = vmatmul.bf16.gmra.mxu0 %v804
      %v831 = vpop.f32.mrf.mxu0
      %v832 = vadd.f32 0.0, %v831
      %v833 = vpop.f32.mrf.mxu0
      %v834 = vadd.f32 0.0, %v833
      %835 = vmatmul.bf16.gmra.mxu0 %v807
      %v836 = vpop.f32.mrf.mxu0
      %v837 = vadd.f32 0.0, %v836
      %v838 = vpop.f32.mrf.mxu0
      %v839 = vadd.f32 0.0, %v838
      %840 = vdwg.mxu0
      %v841 = vadd.f32 %v759, %v822
      %v842 = vadd.f32 %v760, %v824
      %v843 = vadd.f32 %v761, %v827
      %v844 = vadd.f32 %v762, %v829
      %v845 = vadd.f32 %v763, %v832
      %v846 = vadd.f32 %v764, %v834
      %v847 = vadd.f32 %v765, %v837
      %v848 = vadd.f32 %v766, %v839
      %v849 = vld [vmem:[%s414] sm:$0xf]
      %v850 = vld [vmem:[%s414 + $0x8] sm:$0xf]
      %v851 = vld [vmem:[%s414 + $0x10] sm:$0xf]
      %v852 = vld [vmem:[%s414 + $0x18] sm:$0xf]
      %v853 = vld [vmem:[%s414 + $0x20] sm:$0xf]
      %v854 = vld [vmem:[%s414 + $0x28] sm:$0xf]
      %v855 = vld [vmem:[%s414 + $0x30] sm:$0xf]
      %v856 = vld [vmem:[%s414 + $0x38] sm:$0xf]
      %s857 = scalar_lea.vmem %s4, 8
      %v858 = vld [vmem:[%s857] sm:$0x3]
      %v867 = vunpack.c.l.b16 %v849
      %v868 = vunpack.c.l.b16 %v850
      %v869 = vunpack.c.l.b16 %v851
      %v870 = vunpack.c.l.b16 %v852
      %v871 = vunpack.c.l.b16 %v853
      %v872 = vunpack.c.l.b16 %v854
      %v873 = vunpack.c.l.b16 %v855
      %v874 = vunpack.c.l.b16 %v856
      %v875 = vpack.c.b16 %v868, %v867
      %v876 = vpack.c.b16 %v870, %v869
      %v877 = vpack.c.b16 %v872, %v871
      %v878 = vpack.c.b16 %v874, %v873
      %v880 = vsel %vm460, %v875, 0
      %v883 = vsel %vm460, %v876, 0
      %v886 = vsel %vm460, %v877, 0
      %v889 = vsel %vm460, %v878, 0
      %v892 = vsel %vm473, %v858, 0
      %894 = vmatpush.bf16.msra.mxu0 0
      %895 = vmatpush.bf16.msra.mxu0 0
      %896 = vmatpush.bf16.msra.mxu0 0
      %897 = vmatpush.bf16.msra.mxu0 0
      %898 = vmatpush.bf16.msra.mxu0 0
      %899 = vmatpush.bf16.msra.mxu0 0
      %900 = vmatpush.bf16.msra.mxu0 0
      %901 = vmatpush.bf16.msra.mxu0 %v892
      %902 = vmatmul.bf16.gmra.mxu0 %v880
      %v903 = vpop.f32.mrf.mxu0
      %v904 = vadd.f32 0.0, %v903
      %v905 = vpop.f32.mrf.mxu0
      %v906 = vadd.f32 0.0, %v905
      %907 = vmatmul.bf16.gmra.mxu0 %v883
      %v908 = vpop.f32.mrf.mxu0
      %v909 = vadd.f32 0.0, %v908
      %v910 = vpop.f32.mrf.mxu0
      %v911 = vadd.f32 0.0, %v910
      %912 = vmatmul.bf16.gmra.mxu0 %v886
      %v913 = vpop.f32.mrf.mxu0
      %v914 = vadd.f32 0.0, %v913
      %v915 = vpop.f32.mrf.mxu0
      %v916 = vadd.f32 0.0, %v915
      %917 = vmatmul.bf16.gmra.mxu0 %v889
      %v918 = vpop.f32.mrf.mxu0
      %v919 = vadd.f32 0.0, %v918
      %v920 = vpop.f32.mrf.mxu0
      %v921 = vadd.f32 0.0, %v920
      %922 = vdwg.mxu0
      %v923 = vadd.f32 %v841, %v904
      %v924 = vadd.f32 %v842, %v906
      %v925 = vadd.f32 %v843, %v909
      %v926 = vadd.f32 %v844, %v911
      %v927 = vadd.f32 %v845, %v914
      %v928 = vadd.f32 %v846, %v916
      %v929 = vadd.f32 %v847, %v919
      %v930 = vadd.f32 %v848, %v921
      %v931 = vld [vmem:[%s409] sm:$0xf]
      %v932 = vld [vmem:[%s409 + $0x4] sm:$0x1]
      %v933 = vld [vmem:[%s409 + $0x8] sm:$0xf]
      %v934 = vld [vmem:[%s409 + $0xc] sm:$0x1]
      %v935 = vld [vmem:[%s409 + $0x10] sm:$0xf]
      %v936 = vld [vmem:[%s409 + $0x14] sm:$0x1]
      %v937 = vld [vmem:[%s409 + $0x18] sm:$0xf]
      %v938 = vld [vmem:[%s409 + $0x1c] sm:$0x1]
      %v939 = vld [vmem:[%s409 + $0x20] sm:$0xf]
      %v940 = vld [vmem:[%s409 + $0x24] sm:$0x1]
      %v941 = vld [vmem:[%s409 + $0x28] sm:$0xf]
      %v942 = vld [vmem:[%s409 + $0x2c] sm:$0x1]
      %v943 = vld [vmem:[%s409 + $0x30] sm:$0xf]
      %v944 = vld [vmem:[%s409 + $0x34] sm:$0x1]
      %v945 = vld [vmem:[%s409 + $0x38] sm:$0xf]
      %v946 = vld [vmem:[%s409 + $0x3c] sm:$0x1]
      %v948 = vshrl.u32 %v931, 16
      %v950 = vrot.slane %v948, 4
      %v951 = vshll.u32 %v931, 16
      %v953 = vrot.slane %v951, 5
      %v954 = vor.u32 %v950, %v953
      %v955 = vrot.slane %v954, 4
      %v957 = vshll.u32 %v932, 16
      %v959 = vrot.slane %v957, 5
      %v960 = vsel %vm588, %v955, %v959
      %v962 = vshrl.u32 %v933, 16
      %v964 = vrot.slane %v962, 4
      %v965 = vshll.u32 %v933, 16
      %v967 = vrot.slane %v965, 5
      %v968 = vor.u32 %v964, %v967
      %v969 = vrot.slane %v968, 4
      %v971 = vshll.u32 %v934, 16
      %v973 = vrot.slane %v971, 5
      %v974 = vsel %vm588, %v969, %v973
      %v976 = vshrl.u32 %v935, 16
      %v978 = vrot.slane %v976, 4
      %v979 = vshll.u32 %v935, 16
      %v981 = vrot.slane %v979, 5
      %v982 = vor.u32 %v978, %v981
      %v983 = vrot.slane %v982, 4
      %v985 = vshll.u32 %v936, 16
      %v987 = vrot.slane %v985, 5
      %v988 = vsel %vm588, %v983, %v987
      %v990 = vshrl.u32 %v937, 16
      %v992 = vrot.slane %v990, 4
      %v993 = vshll.u32 %v937, 16
      %v995 = vrot.slane %v993, 5
      %v996 = vor.u32 %v992, %v995
      %v997 = vrot.slane %v996, 4
      %v999 = vshll.u32 %v938, 16
      %v1001 = vrot.slane %v999, 5
      %v1002 = vsel %vm588, %v997, %v1001
      %v1004 = vshrl.u32 %v939, 16
      %v1006 = vrot.slane %v1004, 4
      %v1007 = vshll.u32 %v939, 16
      %v1009 = vrot.slane %v1007, 5
      %v1010 = vor.u32 %v1006, %v1009
      %v1011 = vrot.slane %v1010, 4
      %v1013 = vshll.u32 %v940, 16
      %v1015 = vrot.slane %v1013, 5
      %v1016 = vsel %vm588, %v1011, %v1015
      %v1018 = vshrl.u32 %v941, 16
      %v1020 = vrot.slane %v1018, 4
      %v1021 = vshll.u32 %v941, 16
      %v1023 = vrot.slane %v1021, 5
      %v1024 = vor.u32 %v1020, %v1023
      %v1025 = vrot.slane %v1024, 4
      %v1027 = vshll.u32 %v942, 16
      %v1029 = vrot.slane %v1027, 5
      %v1030 = vsel %vm588, %v1025, %v1029
      %v1032 = vshrl.u32 %v943, 16
      %v1034 = vrot.slane %v1032, 4
      %v1035 = vshll.u32 %v943, 16
      %v1037 = vrot.slane %v1035, 5
      %v1038 = vor.u32 %v1034, %v1037
      %v1039 = vrot.slane %v1038, 4
      %v1041 = vshll.u32 %v944, 16
      %v1043 = vrot.slane %v1041, 5
      %v1044 = vsel %vm588, %v1039, %v1043
      %v1046 = vshrl.u32 %v945, 16
      %v1048 = vrot.slane %v1046, 4
      %v1049 = vshll.u32 %v945, 16
      %v1051 = vrot.slane %v1049, 5
      %v1052 = vor.u32 %v1048, %v1051
      %v1053 = vrot.slane %v1052, 4
      %v1055 = vshll.u32 %v946, 16
      %v1057 = vrot.slane %v1055, 5
      %v1058 = vsel %vm588, %v1053, %v1057
      %s1059 = scalar_lea.vmem %s4, 10
      %v1060 = vld [vmem:[%s1059] sm:$0x3]
      %v1061 = vunpack.c.l.b16 %v960
      %v1062 = vunpack.c.l.b16 %v974
      %v1063 = vunpack.c.l.b16 %v988
      %v1064 = vunpack.c.l.b16 %v1002
      %v1065 = vunpack.c.l.b16 %v1016
      %v1066 = vunpack.c.l.b16 %v1030
      %v1067 = vunpack.c.l.b16 %v1044
      %v1068 = vunpack.c.l.b16 %v1058
      %v1069 = vpack.c.b16 %v1062, %v1061
      %v1070 = vpack.c.b16 %v1064, %v1063
      %v1071 = vpack.c.b16 %v1066, %v1065
      %v1072 = vpack.c.b16 %v1068, %v1067
      %v1074 = vsel %vm460, %v1069, 0
      %v1077 = vsel %vm460, %v1070, 0
      %v1080 = vsel %vm460, %v1071, 0
      %v1083 = vsel %vm460, %v1072, 0
      %v1086 = vsel %vm473, %v1060, 0
      %1088 = vmatpush.bf16.msra.mxu0 0
      %1089 = vmatpush.bf16.msra.mxu0 0
      %1090 = vmatpush.bf16.msra.mxu0 0
      %1091 = vmatpush.bf16.msra.mxu0 0
      %1092 = vmatpush.bf16.msra.mxu0 0
      %1093 = vmatpush.bf16.msra.mxu0 0
      %1094 = vmatpush.bf16.msra.mxu0 0
      %1095 = vmatpush.bf16.msra.mxu0 %v1086
      %1096 = vmatmul.bf16.gmra.mxu0 %v1074
      %v1097 = vpop.f32.mrf.mxu0
      %v1098 = vadd.f32 0.0, %v1097
      %v1099 = vpop.f32.mrf.mxu0
      %v1100 = vadd.f32 0.0, %v1099
      %1101 = vmatmul.bf16.gmra.mxu0 %v1077
      %v1102 = vpop.f32.mrf.mxu0
      %v1103 = vadd.f32 0.0, %v1102
      %v1104 = vpop.f32.mrf.mxu0
      %v1105 = vadd.f32 0.0, %v1104
      %1106 = vmatmul.bf16.gmra.mxu0 %v1080
      %v1107 = vpop.f32.mrf.mxu0
      %v1108 = vadd.f32 0.0, %v1107
      %v1109 = vpop.f32.mrf.mxu0
      %v1110 = vadd.f32 0.0, %v1109
      %1111 = vmatmul.bf16.gmra.mxu0 %v1083
      %v1112 = vpop.f32.mrf.mxu0
      %v1113 = vadd.f32 0.0, %v1112
      %v1114 = vpop.f32.mrf.mxu0
      %v1115 = vadd.f32 0.0, %v1114
      %1116 = vdwg.mxu0
      %v1117 = vadd.f32 %v923, %v1098
      %v1118 = vadd.f32 %v924, %v1100
      %v1119 = vadd.f32 %v925, %v1103
      %v1120 = vadd.f32 %v926, %v1105
      %v1121 = vadd.f32 %v927, %v1108
      %v1122 = vadd.f32 %v928, %v1110
      %v1123 = vadd.f32 %v929, %v1113
      %v1124 = vadd.f32 %v930, %v1115
      %s1125 = scalar_lea.vmem %s399, 8
      %v1126 = vld [vmem:[%s1125] sm:$0xf]
      %v1127 = vld [vmem:[%s1125 + $0x8] sm:$0xf]
      %v1128 = vld [vmem:[%s1125 + $0x10] sm:$0xf]
      %v1129 = vld [vmem:[%s1125 + $0x18] sm:$0xf]
      %v1130 = vld [vmem:[%s1125 + $0x20] sm:$0xf]
      %v1131 = vld [vmem:[%s1125 + $0x28] sm:$0xf]
      %v1132 = vld [vmem:[%s1125 + $0x30] sm:$0xf]
      %v1133 = vld [vmem:[%s1125 + $0x38] sm:$0xf]
      %s1134 = scalar_lea.vmem %s4, 12
      %v1135 = vld [vmem:[%s1134] sm:$0x3]
      %v1144 = vunpack.c.l.b16 %v1126
      %v1145 = vunpack.c.l.b16 %v1127
      %v1146 = vunpack.c.l.b16 %v1128
      %v1147 = vunpack.c.l.b16 %v1129
      %v1148 = vunpack.c.l.b16 %v1130
      %v1149 = vunpack.c.l.b16 %v1131
      %v1150 = vunpack.c.l.b16 %v1132
      %v1151 = vunpack.c.l.b16 %v1133
      %v1152 = vpack.c.b16 %v1145, %v1144
      %v1153 = vpack.c.b16 %v1147, %v1146
      %v1154 = vpack.c.b16 %v1149, %v1148
      %v1155 = vpack.c.b16 %v1151, %v1150
      %v1157 = vsel %vm460, %v1152, 0
      %v1160 = vsel %vm460, %v1153, 0
      %v1163 = vsel %vm460, %v1154, 0
      %v1166 = vsel %vm460, %v1155, 0
      %v1169 = vsel %vm473, %v1135, 0
      %1171 = vmatpush.bf16.msra.mxu0 0
      %1172 = vmatpush.bf16.msra.mxu0 0
      %1173 = vmatpush.bf16.msra.mxu0 0
      %1174 = vmatpush.bf16.msra.mxu0 0
      %1175 = vmatpush.bf16.msra.mxu0 0
      %1176 = vmatpush.bf16.msra.mxu0 0
      %1177 = vmatpush.bf16.msra.mxu0 0
      %1178 = vmatpush.bf16.msra.mxu0 %v1169
      %1179 = vmatmul.bf16.gmra.mxu0 %v1157
      %v1180 = vpop.f32.mrf.mxu0
      %v1181 = vadd.f32 0.0, %v1180
      %v1182 = vpop.f32.mrf.mxu0
      %v1183 = vadd.f32 0.0, %v1182
      %1184 = vmatmul.bf16.gmra.mxu0 %v1160
      %v1185 = vpop.f32.mrf.mxu0
      %v1186 = vadd.f32 0.0, %v1185
      %v1187 = vpop.f32.mrf.mxu0
      %v1188 = vadd.f32 0.0, %v1187
      %1189 = vmatmul.bf16.gmra.mxu0 %v1163
      %v1190 = vpop.f32.mrf.mxu0
      %v1191 = vadd.f32 0.0, %v1190
      %v1192 = vpop.f32.mrf.mxu0
      %v1193 = vadd.f32 0.0, %v1192
      %1194 = vmatmul.bf16.gmra.mxu0 %v1166
      %v1195 = vpop.f32.mrf.mxu0
      %v1196 = vadd.f32 0.0, %v1195
      %v1197 = vpop.f32.mrf.mxu0
      %v1198 = vadd.f32 0.0, %v1197
      %1199 = vdwg.mxu0
      %v1200 = vadd.f32 %v1117, %v1181
      %v1201 = vadd.f32 %v1118, %v1183
      %v1202 = vadd.f32 %v1119, %v1186
      %v1203 = vadd.f32 %v1120, %v1188
      %v1204 = vadd.f32 %v1121, %v1191
      %v1205 = vadd.f32 %v1122, %v1193
      %v1206 = vadd.f32 %v1123, %v1196
      %v1207 = vadd.f32 %v1124, %v1198
      %s1208 = scalar_lea.vmem %s404, 8
      %v1209 = vld [vmem:[%s1208] sm:$0xf]
      %v1210 = vld [vmem:[%s1208 + $0x8] sm:$0xf]
      %v1211 = vld [vmem:[%s1208 + $0x10] sm:$0xf]
      %v1212 = vld [vmem:[%s1208 + $0x18] sm:$0xf]
      %v1213 = vld [vmem:[%s1208 + $0x20] sm:$0xf]
      %v1214 = vld [vmem:[%s1208 + $0x28] sm:$0xf]
      %v1215 = vld [vmem:[%s1208 + $0x30] sm:$0xf]
      %v1216 = vld [vmem:[%s1208 + $0x38] sm:$0xf]
      %s1217 = scalar_lea.vmem %s4, 14
      %v1218 = vld [vmem:[%s1217] sm:$0x3]
      %v1227 = vunpack.c.l.b16 %v1209
      %v1228 = vunpack.c.l.b16 %v1210
      %v1229 = vunpack.c.l.b16 %v1211
      %v1230 = vunpack.c.l.b16 %v1212
      %v1231 = vunpack.c.l.b16 %v1213
      %v1232 = vunpack.c.l.b16 %v1214
      %v1233 = vunpack.c.l.b16 %v1215
      %v1234 = vunpack.c.l.b16 %v1216
      %v1235 = vpack.c.b16 %v1228, %v1227
      %v1236 = vpack.c.b16 %v1230, %v1229
      %v1237 = vpack.c.b16 %v1232, %v1231
      %v1238 = vpack.c.b16 %v1234, %v1233
      %v1240 = vsel %vm460, %v1235, 0
      %v1243 = vsel %vm460, %v1236, 0
      %v1246 = vsel %vm460, %v1237, 0
      %v1249 = vsel %vm460, %v1238, 0
      %v1252 = vsel %vm473, %v1218, 0
      %1254 = vmatpush.bf16.msra.mxu0 0
      %1255 = vmatpush.bf16.msra.mxu0 0
      %1256 = vmatpush.bf16.msra.mxu0 0
      %1257 = vmatpush.bf16.msra.mxu0 0
      %1258 = vmatpush.bf16.msra.mxu0 0
      %1259 = vmatpush.bf16.msra.mxu0 0
      %1260 = vmatpush.bf16.msra.mxu0 0
      %1261 = vmatpush.bf16.msra.mxu0 %v1252
      %1262 = vmatmul.bf16.gmra.mxu0 %v1240
      %v1263 = vpop.f32.mrf.mxu0
      %v1264 = vadd.f32 0.0, %v1263
      %v1265 = vpop.f32.mrf.mxu0
      %v1266 = vadd.f32 0.0, %v1265
      %1267 = vmatmul.bf16.gmra.mxu0 %v1243
      %v1268 = vpop.f32.mrf.mxu0
      %v1269 = vadd.f32 0.0, %v1268
      %v1270 = vpop.f32.mrf.mxu0
      %v1271 = vadd.f32 0.0, %v1270
      %1272 = vmatmul.bf16.gmra.mxu0 %v1246
      %v1273 = vpop.f32.mrf.mxu0
      %v1274 = vadd.f32 0.0, %v1273
      %v1275 = vpop.f32.mrf.mxu0
      %v1276 = vadd.f32 0.0, %v1275
      %1277 = vmatmul.bf16.gmra.mxu0 %v1249
      %v1278 = vpop.f32.mrf.mxu0
      %v1279 = vadd.f32 0.0, %v1278
      %v1280 = vpop.f32.mrf.mxu0
      %v1281 = vadd.f32 0.0, %v1280
      %1282 = vdwg.mxu0
      %v1283 = vadd.f32 %v1200, %v1264
      %v1284 = vadd.f32 %v1201, %v1266
      %v1285 = vadd.f32 %v1202, %v1269
      %v1286 = vadd.f32 %v1203, %v1271
      %v1287 = vadd.f32 %v1204, %v1274
      %v1288 = vadd.f32 %v1205, %v1276
      %v1289 = vadd.f32 %v1206, %v1279
      %v1290 = vadd.f32 %v1207, %v1281
      %v1291 = vld [vmem:[%s1125] sm:$0xf]
      %v1292 = vld [vmem:[%s1125 + $0x4] sm:$0x1]
      %v1293 = vld [vmem:[%s1125 + $0x8] sm:$0xf]
      %v1294 = vld [vmem:[%s1125 + $0xc] sm:$0x1]
      %v1295 = vld [vmem:[%s1125 + $0x10] sm:$0xf]
      %v1296 = vld [vmem:[%s1125 + $0x14] sm:$0x1]
      %v1297 = vld [vmem:[%s1125 + $0x18] sm:$0xf]
      %v1298 = vld [vmem:[%s1125 + $0x1c] sm:$0x1]
      %v1299 = vld [vmem:[%s1125 + $0x20] sm:$0xf]
      %v1300 = vld [vmem:[%s1125 + $0x24] sm:$0x1]
      %v1301 = vld [vmem:[%s1125 + $0x28] sm:$0xf]
      %v1302 = vld [vmem:[%s1125 + $0x2c] sm:$0x1]
      %v1303 = vld [vmem:[%s1125 + $0x30] sm:$0xf]
      %v1304 = vld [vmem:[%s1125 + $0x34] sm:$0x1]
      %v1305 = vld [vmem:[%s1125 + $0x38] sm:$0xf]
      %v1306 = vld [vmem:[%s1125 + $0x3c] sm:$0x1]
      %v1308 = vshrl.u32 %v1291, 16
      %v1310 = vrot.slane %v1308, 4
      %v1311 = vshll.u32 %v1291, 16
      %v1313 = vrot.slane %v1311, 5
      %v1314 = vor.u32 %v1310, %v1313
      %v1315 = vrot.slane %v1314, 4
      %v1317 = vshll.u32 %v1292, 16
      %v1319 = vrot.slane %v1317, 5
      %v1320 = vsel %vm588, %v1315, %v1319
      %v1322 = vshrl.u32 %v1293, 16
      %v1324 = vrot.slane %v1322, 4
      %v1325 = vshll.u32 %v1293, 16
      %v1327 = vrot.slane %v1325, 5
      %v1328 = vor.u32 %v1324, %v1327
      %v1329 = vrot.slane %v1328, 4
      %v1331 = vshll.u32 %v1294, 16
      %v1333 = vrot.slane %v1331, 5
      %v1334 = vsel %vm588, %v1329, %v1333
      %v1336 = vshrl.u32 %v1295, 16
      %v1338 = vrot.slane %v1336, 4
      %v1339 = vshll.u32 %v1295, 16
      %v1341 = vrot.slane %v1339, 5
      %v1342 = vor.u32 %v1338, %v1341
      %v1343 = vrot.slane %v1342, 4
      %v1345 = vshll.u32 %v1296, 16
      %v1347 = vrot.slane %v1345, 5
      %v1348 = vsel %vm588, %v1343, %v1347
      %v1350 = vshrl.u32 %v1297, 16
      %v1352 = vrot.slane %v1350, 4
      %v1353 = vshll.u32 %v1297, 16
      %v1355 = vrot.slane %v1353, 5
      %v1356 = vor.u32 %v1352, %v1355
      %v1357 = vrot.slane %v1356, 4
      %v1359 = vshll.u32 %v1298, 16
      %v1361 = vrot.slane %v1359, 5
      %v1362 = vsel %vm588, %v1357, %v1361
      %v1364 = vshrl.u32 %v1299, 16
      %v1366 = vrot.slane %v1364, 4
      %v1367 = vshll.u32 %v1299, 16
      %v1369 = vrot.slane %v1367, 5
      %v1370 = vor.u32 %v1366, %v1369
      %v1371 = vrot.slane %v1370, 4
      %v1373 = vshll.u32 %v1300, 16
      %v1375 = vrot.slane %v1373, 5
      %v1376 = vsel %vm588, %v1371, %v1375
      %v1378 = vshrl.u32 %v1301, 16
      %v1380 = vrot.slane %v1378, 4
      %v1381 = vshll.u32 %v1301, 16
      %v1383 = vrot.slane %v1381, 5
      %v1384 = vor.u32 %v1380, %v1383
      %v1385 = vrot.slane %v1384, 4
      %v1387 = vshll.u32 %v1302, 16
      %v1389 = vrot.slane %v1387, 5
      %v1390 = vsel %vm588, %v1385, %v1389
      %v1392 = vshrl.u32 %v1303, 16
      %v1394 = vrot.slane %v1392, 4
      %v1395 = vshll.u32 %v1303, 16
      %v1397 = vrot.slane %v1395, 5
      %v1398 = vor.u32 %v1394, %v1397
      %v1399 = vrot.slane %v1398, 4
      %v1401 = vshll.u32 %v1304, 16
      %v1403 = vrot.slane %v1401, 5
      %v1404 = vsel %vm588, %v1399, %v1403
      %v1406 = vshrl.u32 %v1305, 16
      %v1408 = vrot.slane %v1406, 4
      %v1409 = vshll.u32 %v1305, 16
      %v1411 = vrot.slane %v1409, 5
      %v1412 = vor.u32 %v1408, %v1411
      %v1413 = vrot.slane %v1412, 4
      %v1415 = vshll.u32 %v1306, 16
      %v1417 = vrot.slane %v1415, 5
      %v1418 = vsel %vm588, %v1413, %v1417
      %s1419 = scalar_lea.vmem %s4, 16
      %v1420 = vld [vmem:[%s1419] sm:$0x3]
      %v1421 = vunpack.c.l.b16 %v1320
      %v1422 = vunpack.c.l.b16 %v1334
      %v1423 = vunpack.c.l.b16 %v1348
      %v1424 = vunpack.c.l.b16 %v1362
      %v1425 = vunpack.c.l.b16 %v1376
      %v1426 = vunpack.c.l.b16 %v1390
      %v1427 = vunpack.c.l.b16 %v1404
      %v1428 = vunpack.c.l.b16 %v1418
      %v1429 = vpack.c.b16 %v1422, %v1421
      %v1430 = vpack.c.b16 %v1424, %v1423
      %v1431 = vpack.c.b16 %v1426, %v1425
      %v1432 = vpack.c.b16 %v1428, %v1427
      %v1434 = vsel %vm460, %v1429, 0
      %v1437 = vsel %vm460, %v1430, 0
      %v1440 = vsel %vm460, %v1431, 0
      %v1443 = vsel %vm460, %v1432, 0
      %v1446 = vsel %vm473, %v1420, 0
      %1448 = vmatpush.bf16.msra.mxu0 0
      %1449 = vmatpush.bf16.msra.mxu0 0
      %1450 = vmatpush.bf16.msra.mxu0 0
      %1451 = vmatpush.bf16.msra.mxu0 0
      %1452 = vmatpush.bf16.msra.mxu0 0
      %1453 = vmatpush.bf16.msra.mxu0 0
      %1454 = vmatpush.bf16.msra.mxu0 0
      %1455 = vmatpush.bf16.msra.mxu0 %v1446
      %1456 = vmatmul.bf16.gmra.mxu0 %v1434
      %v1457 = vpop.f32.mrf.mxu0
      %v1458 = vadd.f32 0.0, %v1457
      %v1459 = vpop.f32.mrf.mxu0
      %v1460 = vadd.f32 0.0, %v1459
      %1461 = vmatmul.bf16.gmra.mxu0 %v1437
      %v1462 = vpop.f32.mrf.mxu0
      %v1463 = vadd.f32 0.0, %v1462
      %v1464 = vpop.f32.mrf.mxu0
      %v1465 = vadd.f32 0.0, %v1464
      %1466 = vmatmul.bf16.gmra.mxu0 %v1440
      %v1467 = vpop.f32.mrf.mxu0
      %v1468 = vadd.f32 0.0, %v1467
      %v1469 = vpop.f32.mrf.mxu0
      %v1470 = vadd.f32 0.0, %v1469
      %1471 = vmatmul.bf16.gmra.mxu0 %v1443
      %v1472 = vpop.f32.mrf.mxu0
      %v1473 = vadd.f32 0.0, %v1472
      %v1474 = vpop.f32.mrf.mxu0
      %v1475 = vadd.f32 0.0, %v1474
      %1476 = vdwg.mxu0
      %v1477 = vadd.f32 %v1283, %v1458
      %v1478 = vadd.f32 %v1284, %v1460
      %v1479 = vadd.f32 %v1285, %v1463
      %v1480 = vadd.f32 %v1286, %v1465
      %v1481 = vadd.f32 %v1287, %v1468
      %v1482 = vadd.f32 %v1288, %v1470
      %v1483 = vadd.f32 %v1289, %v1473
      %v1484 = vadd.f32 %v1290, %v1475
      %v1485 = vld [vmem:[%s5] sm:$0x1]
      %v1487 = vperm.slane %v1485, 0
      %v1489 = vadd.f32 %v1477, %v1487
      %v1490 = vadd.f32 %v1478, %v1487
      %v1491 = vadd.f32 %v1479, %v1487
      %v1492 = vadd.f32 %v1480, %v1487
      %v1493 = vadd.f32 %v1481, %v1487
      %v1494 = vadd.f32 %v1482, %v1487
      %v1495 = vadd.f32 %v1483, %v1487
      %v1496 = vadd.f32 %v1484, %v1487
      %v1497 = vmax.f32 %v1489, 0.0
      %v1498 = vmax.f32 %v1490, 0.0
      %v1499 = vmax.f32 %v1491, 0.0
      %v1500 = vmax.f32 %v1492, 0.0
      %v1501 = vmax.f32 %v1493, 0.0
      %v1502 = vmax.f32 %v1494, 0.0
      %v1503 = vmax.f32 %v1495, 0.0
      %v1504 = vmax.f32 %v1496, 0.0
      %vm1505 = vcmask 60416
      %1506 = vst.msk [vmem:[#allocation2] sm:$0xf] %vm1505, 0
      %vm1507 = vcmask 57344
      %1508 = vst.msk [vmem:[#allocation2 + $0x4] sm:$0x1] %vm1507, 0
      %s1509 = scalar_lea.vmem [#allocation2], 72
      %1510 = vst.msk [vmem:[%s1509] sm:$0xf] %vm1505, 0
      %1511 = vst.msk [vmem:[%s1509 + $0x4] sm:$0x1] %vm1507, 0
      %vm1512 = vcmask 57344
      %vm1513 = vsmask.f32 256
      %vm1514 = vmand %vm1512, %vm1513
      %v1515 = vld [vmem:[#allocation2] sm:$0x1]
      %v1516 = vsel %vm1514, 0, %v1515
      %1517 = vst [vmem:[#allocation2] sm:$0x1] %v1516
      %v1518 = vld [vmem:[#allocation2 + $0x8] sm:$0x1]
      %v1519 = vsel %vm1514, 0, %v1518
      %1520 = vst [vmem:[#allocation2 + $0x8] sm:$0x1] %v1519
      %v1521 = vld [vmem:[#allocation2 + $0x10] sm:$0x1]
      %v1522 = vsel %vm1514, 0, %v1521
      %1523 = vst [vmem:[#allocation2 + $0x10] sm:$0x1] %v1522
      %v1524 = vld [vmem:[#allocation2 + $0x18] sm:$0x1]
      %v1525 = vsel %vm1514, 0, %v1524
      %1526 = vst [vmem:[#allocation2 + $0x18] sm:$0x1] %v1525
      %v1527 = vld [vmem:[#allocation2 + $0x20] sm:$0x1]
      %v1528 = vsel %vm1514, 0, %v1527
      %1529 = vst [vmem:[#allocation2 + $0x20] sm:$0x1] %v1528
      %v1530 = vld [vmem:[#allocation2 + $0x28] sm:$0x1]
      %v1531 = vsel %vm1514, 0, %v1530
      %1532 = vst [vmem:[#allocation2 + $0x28] sm:$0x1] %v1531
      %v1533 = vld [vmem:[#allocation2 + $0x30] sm:$0x1]
      %v1534 = vsel %vm1514, 0, %v1533
      %1535 = vst [vmem:[#allocation2 + $0x30] sm:$0x1] %v1534
      %v1536 = vld [vmem:[#allocation2 + $0x38] sm:$0x1]
      %v1537 = vsel %vm1514, 0, %v1536
      %1538 = vst [vmem:[#allocation2 + $0x38] sm:$0x1] %v1537
      %v1539 = vld [vmem:[#allocation2 + $0x40] sm:$0x1]
      %v1540 = vsel %vm1514, 0, %v1539
      %1541 = vst [vmem:[#allocation2 + $0x40] sm:$0x1] %v1540
      %v1542 = vld [vmem:[#allocation2 + $0x48] sm:$0x1]
      %v1543 = vsel %vm1514, 0, %v1542
      %1544 = vst [vmem:[#allocation2 + $0x48] sm:$0x1] %v1543
      %vm1545 = vsmask.f32 7938
      %vm1546 = vmand %vm1512, %vm1545
      %v1547 = vld [vmem:[#allocation2 + $0x4] sm:$0x1]
      %v1548 = vsel %vm1546, 0, %v1547
      %1549 = vst [vmem:[#allocation2 + $0x4] sm:$0x1] %v1548
      %v1550 = vld [vmem:[#allocation2 + $0xc] sm:$0x1]
      %v1551 = vsel %vm1546, 0, %v1550
      %1552 = vst [vmem:[#allocation2 + $0xc] sm:$0x1] %v1551
      %v1553 = vld [vmem:[#allocation2 + $0x14] sm:$0x1]
      %v1554 = vsel %vm1546, 0, %v1553
      %1555 = vst [vmem:[#allocation2 + $0x14] sm:$0x1] %v1554
      %v1556 = vld [vmem:[#allocation2 + $0x1c] sm:$0x1]
      %v1557 = vsel %vm1546, 0, %v1556
      %1558 = vst [vmem:[#allocation2 + $0x1c] sm:$0x1] %v1557
      %v1559 = vld [vmem:[#allocation2 + $0x24] sm:$0x1]
      %v1560 = vsel %vm1546, 0, %v1559
      %1561 = vst [vmem:[#allocation2 + $0x24] sm:$0x1] %v1560
      %v1562 = vld [vmem:[#allocation2 + $0x2c] sm:$0x1]
      %v1563 = vsel %vm1546, 0, %v1562
      %1564 = vst [vmem:[#allocation2 + $0x2c] sm:$0x1] %v1563
      %v1565 = vld [vmem:[#allocation2 + $0x34] sm:$0x1]
      %v1566 = vsel %vm1546, 0, %v1565
      %1567 = vst [vmem:[#allocation2 + $0x34] sm:$0x1] %v1566
      %v1568 = vld [vmem:[#allocation2 + $0x3c] sm:$0x1]
      %v1569 = vsel %vm1546, 0, %v1568
      %1570 = vst [vmem:[#allocation2 + $0x3c] sm:$0x1] %v1569
      %v1571 = vld [vmem:[#allocation2 + $0x44] sm:$0x1]
      %v1572 = vsel %vm1546, 0, %v1571
      %1573 = vst [vmem:[#allocation2 + $0x44] sm:$0x1] %v1572
      %v1574 = vld [vmem:[#allocation2 + $0x4c] sm:$0x1]
      %v1575 = vsel %vm1546, 0, %v1574
      %1576 = vst [vmem:[#allocation2 + $0x4c] sm:$0x1] %v1575
      %v1577 = vpack.c.bf16 %v1497, %v1497
      %v1578 = vpack.c.bf16 %v1498, %v1498
      %v1579 = vpack.c.bf16 %v1499, %v1499
      %v1580 = vpack.c.bf16 %v1500, %v1500
      %v1581 = vpack.c.bf16 %v1501, %v1501
      %v1582 = vpack.c.bf16 %v1502, %v1502
      %v1583 = vpack.c.bf16 %v1503, %v1503
      %v1584 = vpack.c.bf16 %v1504, %v1504
      %v1586 = vshrl.u32 %v1577, 16
      %v1588 = vrot.slane %v1586, 7
      %v1589 = vshll.u32 %v1577, 16
      %v1591 = vor.u32 %v1588, %v1589
      %v1592 = vrot.slane %v1588, 4
      %v1594 = vshrl.u32 %v1578, 16
      %v1596 = vrot.slane %v1594, 7
      %v1597 = vshll.u32 %v1578, 16
      %v1599 = vor.u32 %v1596, %v1597
      %v1600 = vrot.slane %v1596, 4
      %v1602 = vshrl.u32 %v1579, 16
      %v1604 = vrot.slane %v1602, 7
      %v1605 = vshll.u32 %v1579, 16
      %v1607 = vor.u32 %v1604, %v1605
      %v1608 = vrot.slane %v1604, 4
      %v1610 = vshrl.u32 %v1580, 16
      %v1612 = vrot.slane %v1610, 7
      %v1613 = vshll.u32 %v1580, 16
      %v1615 = vor.u32 %v1612, %v1613
      %v1616 = vrot.slane %v1612, 4
      %v1618 = vshrl.u32 %v1581, 16
      %v1620 = vrot.slane %v1618, 7
      %v1621 = vshll.u32 %v1581, 16
      %v1623 = vor.u32 %v1620, %v1621
      %v1624 = vrot.slane %v1620, 4
      %v1626 = vshrl.u32 %v1582, 16
      %v1628 = vrot.slane %v1626, 7
      %v1629 = vshll.u32 %v1582, 16
      %v1631 = vor.u32 %v1628, %v1629
      %v1632 = vrot.slane %v1628, 4
      %v1634 = vshrl.u32 %v1583, 16
      %v1636 = vrot.slane %v1634, 7
      %v1637 = vshll.u32 %v1583, 16
      %v1639 = vor.u32 %v1636, %v1637
      %v1640 = vrot.slane %v1636, 4
      %v1642 = vshrl.u32 %v1584, 16
      %v1644 = vrot.slane %v1642, 7
      %v1645 = vshll.u32 %v1584, 16
      %v1647 = vor.u32 %v1644, %v1645
      %v1648 = vrot.slane %v1644, 4
      %s1665 = scalar_lea.vmem [#allocation2], 8
      %vm1666 = vcmask 60416
      %vm1667 = vmand %vm1666, %vm1545
      %v1668 = vld [vmem:[%s1665] sm:$0xf]
      %v1669 = vsel %vm1667, %v1591, %v1668
      %1670 = vst [vmem:[%s1665] sm:$0xf] %v1669
      %v1671 = vld [vmem:[%s1665 + $0x4] sm:$0x1]
      %v1672 = vsel %vm1514, %v1592, %v1671
      %1673 = vst [vmem:[%s1665 + $0x4] sm:$0x1] %v1672
      %v1674 = vld [vmem:[%s1665 + $0x8] sm:$0xf]
      %v1675 = vsel %vm1667, %v1599, %v1674
      %1676 = vst [vmem:[%s1665 + $0x8] sm:$0xf] %v1675
      %v1677 = vld [vmem:[%s1665 + $0xc] sm:$0x1]
      %v1678 = vsel %vm1514, %v1600, %v1677
      %1679 = vst [vmem:[%s1665 + $0xc] sm:$0x1] %v1678
      %v1680 = vld [vmem:[%s1665 + $0x10] sm:$0xf]
      %v1681 = vsel %vm1667, %v1607, %v1680
      %1682 = vst [vmem:[%s1665 + $0x10] sm:$0xf] %v1681
      %v1683 = vld [vmem:[%s1665 + $0x14] sm:$0x1]
      %v1684 = vsel %vm1514, %v1608, %v1683
      %1685 = vst [vmem:[%s1665 + $0x14] sm:$0x1] %v1684
      %v1686 = vld [vmem:[%s1665 + $0x18] sm:$0xf]
      %v1687 = vsel %vm1667, %v1615, %v1686
      %1688 = vst [vmem:[%s1665 + $0x18] sm:$0xf] %v1687
      %v1689 = vld [vmem:[%s1665 + $0x1c] sm:$0x1]
      %v1690 = vsel %vm1514, %v1616, %v1689
      %1691 = vst [vmem:[%s1665 + $0x1c] sm:$0x1] %v1690
      %v1692 = vld [vmem:[%s1665 + $0x20] sm:$0xf]
      %v1693 = vsel %vm1667, %v1623, %v1692
      %1694 = vst [vmem:[%s1665 + $0x20] sm:$0xf] %v1693
      %v1695 = vld [vmem:[%s1665 + $0x24] sm:$0x1]
      %v1696 = vsel %vm1514, %v1624, %v1695
      %1697 = vst [vmem:[%s1665 + $0x24] sm:$0x1] %v1696
      %v1698 = vld [vmem:[%s1665 + $0x28] sm:$0xf]
      %v1699 = vsel %vm1667, %v1631, %v1698
      %1700 = vst [vmem:[%s1665 + $0x28] sm:$0xf] %v1699
      %v1701 = vld [vmem:[%s1665 + $0x2c] sm:$0x1]
      %v1702 = vsel %vm1514, %v1632, %v1701
      %1703 = vst [vmem:[%s1665 + $0x2c] sm:$0x1] %v1702
      %v1704 = vld [vmem:[%s1665 + $0x30] sm:$0xf]
      %v1705 = vsel %vm1667, %v1639, %v1704
      %1706 = vst [vmem:[%s1665 + $0x30] sm:$0xf] %v1705
      %v1707 = vld [vmem:[%s1665 + $0x34] sm:$0x1]
      %v1708 = vsel %vm1514, %v1640, %v1707
      %1709 = vst [vmem:[%s1665 + $0x34] sm:$0x1] %v1708
      %v1710 = vld [vmem:[%s1665 + $0x38] sm:$0xf]
      %v1711 = vsel %vm1667, %v1647, %v1710
      %1712 = vst [vmem:[%s1665 + $0x38] sm:$0xf] %v1711
      %v1713 = vld [vmem:[%s1665 + $0x3c] sm:$0x1]
      %v1714 = vsel %vm1514, %v1648, %v1713
      %1715 = vst [vmem:[%s1665 + $0x3c] sm:$0x1] %v1714
      %v1716 = vld [vmem:[#allocation2] sm:$0xf]
      %v1717 = vld [vmem:[#allocation2 + $0x8] sm:$0xf]
      %v1718 = vld [vmem:[#allocation2 + $0x10] sm:$0xf]
      %v1719 = vld [vmem:[#allocation2 + $0x18] sm:$0xf]
      %v1720 = vld [vmem:[#allocation2 + $0x20] sm:$0xf]
      %v1721 = vld [vmem:[#allocation2 + $0x28] sm:$0xf]
      %v1722 = vld [vmem:[#allocation2 + $0x30] sm:$0xf]
      %v1723 = vld [vmem:[#allocation2 + $0x38] sm:$0xf]
      %v1724 = vld [vmem:[%s6] sm:$0xf]
      %v1725 = vld [vmem:[#allocation2 + $0x4] sm:$0x1]
      %v1726 = vld [vmem:[#allocation2 + $0xc] sm:$0x1]
      %v1727 = vld [vmem:[#allocation2 + $0x14] sm:$0x1]
      %v1728 = vld [vmem:[#allocation2 + $0x1c] sm:$0x1]
      %v1729 = vld [vmem:[#allocation2 + $0x24] sm:$0x1]
      %v1730 = vld [vmem:[#allocation2 + $0x2c] sm:$0x1]
      %v1731 = vld [vmem:[#allocation2 + $0x34] sm:$0x1]
      %v1732 = vld [vmem:[#allocation2 + $0x3c] sm:$0x1]
      %v1734 = vshrl.u32 %v1716, 16
      %v1736 = vrot.slane %v1734, 4
      %v1737 = vshll.u32 %v1716, 16
      %v1739 = vrot.slane %v1737, 5
      %v1740 = vor.u32 %v1736, %v1739
      %v1741 = vrot.slane %v1740, 4
      %v1743 = vshll.u32 %v1725, 16
      %v1745 = vrot.slane %v1743, 5
      %v1746 = vsel %vm588, %v1741, %v1745
      %v1748 = vshrl.u32 %v1717, 16
      %v1750 = vrot.slane %v1748, 4
      %v1751 = vshll.u32 %v1717, 16
      %v1753 = vrot.slane %v1751, 5
      %v1754 = vor.u32 %v1750, %v1753
      %v1755 = vrot.slane %v1754, 4
      %v1757 = vshll.u32 %v1726, 16
      %v1759 = vrot.slane %v1757, 5
      %v1760 = vsel %vm588, %v1755, %v1759
      %v1762 = vshrl.u32 %v1718, 16
      %v1764 = vrot.slane %v1762, 4
      %v1765 = vshll.u32 %v1718, 16
      %v1767 = vrot.slane %v1765, 5
      %v1768 = vor.u32 %v1764, %v1767
      %v1769 = vrot.slane %v1768, 4
      %v1771 = vshll.u32 %v1727, 16
      %v1773 = vrot.slane %v1771, 5
      %v1774 = vsel %vm588, %v1769, %v1773
      %v1776 = vshrl.u32 %v1719, 16
      %v1778 = vrot.slane %v1776, 4
      %v1779 = vshll.u32 %v1719, 16
      %v1781 = vrot.slane %v1779, 5
      %v1782 = vor.u32 %v1778, %v1781
      %v1783 = vrot.slane %v1782, 4
      %v1785 = vshll.u32 %v1728, 16
      %v1787 = vrot.slane %v1785, 5
      %v1788 = vsel %vm588, %v1783, %v1787
      %v1790 = vshrl.u32 %v1720, 16
      %v1792 = vrot.slane %v1790, 4
      %v1793 = vshll.u32 %v1720, 16
      %v1795 = vrot.slane %v1793, 5
      %v1796 = vor.u32 %v1792, %v1795
      %v1797 = vrot.slane %v1796, 4
      %v1799 = vshll.u32 %v1729, 16
      %v1801 = vrot.slane %v1799, 5
      %v1802 = vsel %vm588, %v1797, %v1801
      %v1804 = vshrl.u32 %v1721, 16
      %v1806 = vrot.slane %v1804, 4
      %v1807 = vshll.u32 %v1721, 16
      %v1809 = vrot.slane %v1807, 5
      %v1810 = vor.u32 %v1806, %v1809
      %v1811 = vrot.slane %v1810, 4
      %v1813 = vshll.u32 %v1730, 16
      %v1815 = vrot.slane %v1813, 5
      %v1816 = vsel %vm588, %v1811, %v1815
      %v1818 = vshrl.u32 %v1722, 16
      %v1820 = vrot.slane %v1818, 4
      %v1821 = vshll.u32 %v1722, 16
      %v1823 = vrot.slane %v1821, 5
      %v1824 = vor.u32 %v1820, %v1823
      %v1825 = vrot.slane %v1824, 4
      %v1827 = vshll.u32 %v1731, 16
      %v1829 = vrot.slane %v1827, 5
      %v1830 = vsel %vm588, %v1825, %v1829
      %v1832 = vshrl.u32 %v1723, 16
      %v1834 = vrot.slane %v1832, 4
      %v1835 = vshll.u32 %v1723, 16
      %v1837 = vrot.slane %v1835, 5
      %v1838 = vor.u32 %v1834, %v1837
      %v1839 = vrot.slane %v1838, 4
      %v1841 = vshll.u32 %v1732, 16
      %v1843 = vrot.slane %v1841, 5
      %v1844 = vsel %vm588, %v1839, %v1843
      %s1845 = scalar_lea.vmem %s6, 4
      %v1846 = vld [vmem:[%s1845] sm:$0xf]
      %v1847 = vunpack.c.l.b16 %v1746
      %v1848 = vunpack.c.l.b16 %v1760
      %v1849 = vunpack.c.l.b16 %v1774
      %v1850 = vunpack.c.l.b16 %v1788
      %v1851 = vunpack.c.l.b16 %v1802
      %v1852 = vunpack.c.l.b16 %v1816
      %v1853 = vunpack.c.l.b16 %v1830
      %v1854 = vunpack.c.l.b16 %v1844
      %v1855 = vpack.c.b16 %v1848, %v1847
      %v1856 = vpack.c.b16 %v1850, %v1849
      %v1857 = vpack.c.b16 %v1852, %v1851
      %v1858 = vpack.c.b16 %v1854, %v1853
      %vm1859 = vcmask 64512
      %v1861 = vsel %vm1859, %v1855, 0
      %v1864 = vsel %vm1859, %v1856, 0
      %v1867 = vsel %vm1859, %v1857, 0
      %v1870 = vsel %vm1859, %v1858, 0
      %vm1872 = vcmask 1043456
      %v1874 = vsel %vm1872, %v1846, 0
      %1876 = vmatpush.bf16.msra.mxu0 0
      %1877 = vmatpush.bf16.msra.mxu0 0
      %1878 = vmatpush.bf16.msra.mxu0 0
      %1879 = vmatpush.bf16.msra.mxu0 0
      %1880 = vmatpush.bf16.msra.mxu0 0
      %1881 = vmatpush.bf16.msra.mxu0 0
      %1882 = vmatpush.bf16.msra.mxu0 0
      %1883 = vmatpush.bf16.msra.mxu0 %v1874
      %1884 = vmatmul.bf16.gmra.mxu0 %v1861
      %v1885 = vpop.f32.mrf.mxu0
      %v1886 = vadd.f32 0.0, %v1885
      %v1887 = vpop.f32.mrf.mxu0
      %v1888 = vadd.f32 0.0, %v1887
      %1889 = vmatmul.bf16.gmra.mxu0 %v1864
      %v1890 = vpop.f32.mrf.mxu0
      %v1891 = vadd.f32 0.0, %v1890
      %v1892 = vpop.f32.mrf.mxu0
      %v1893 = vadd.f32 0.0, %v1892
      %1894 = vmatmul.bf16.gmra.mxu0 %v1867
      %v1895 = vpop.f32.mrf.mxu0
      %v1896 = vadd.f32 0.0, %v1895
      %v1897 = vpop.f32.mrf.mxu0
      %v1898 = vadd.f32 0.0, %v1897
      %1899 = vmatmul.bf16.gmra.mxu0 %v1870
      %v1900 = vpop.f32.mrf.mxu0
      %v1901 = vadd.f32 0.0, %v1900
      %v1902 = vpop.f32.mrf.mxu0
      %v1903 = vadd.f32 0.0, %v1902
      %1904 = vdwg.mxu0
      %v1913 = vunpack.c.l.b16 %v1716
      %v1914 = vunpack.c.l.b16 %v1717
      %v1915 = vunpack.c.l.b16 %v1718
      %v1916 = vunpack.c.l.b16 %v1719
      %v1917 = vunpack.c.l.b16 %v1720
      %v1918 = vunpack.c.l.b16 %v1721
      %v1919 = vunpack.c.l.b16 %v1722
      %v1920 = vunpack.c.l.b16 %v1723
      %v1921 = vpack.c.b16 %v1914, %v1913
      %v1922 = vpack.c.b16 %v1916, %v1915
      %v1923 = vpack.c.b16 %v1918, %v1917
      %v1924 = vpack.c.b16 %v1920, %v1919
      %v1926 = vsel %vm1859, %v1921, 0
      %v1929 = vsel %vm1859, %v1922, 0
      %v1932 = vsel %vm1859, %v1923, 0
      %v1935 = vsel %vm1859, %v1924, 0
      %v1938 = vsel %vm1872, %v1724, 0
      %1940 = vmatpush.bf16.msra.mxu0 0
      %1941 = vmatpush.bf16.msra.mxu0 0
      %1942 = vmatpush.bf16.msra.mxu0 0
      %1943 = vmatpush.bf16.msra.mxu0 0
      %1944 = vmatpush.bf16.msra.mxu0 0
      %1945 = vmatpush.bf16.msra.mxu0 0
      %1946 = vmatpush.bf16.msra.mxu0 0
      %1947 = vmatpush.bf16.msra.mxu0 %v1938
      %1948 = vmatmul.bf16.gmra.mxu0 %v1926
      %v1949 = vpop.f32.mrf.mxu0
      %v1950 = vadd.f32 %v1886, %v1949
      %v1951 = vpop.f32.mrf.mxu0
      %v1952 = vadd.f32 %v1888, %v1951
      %1953 = vmatmul.bf16.gmra.mxu0 %v1929
      %v1954 = vpop.f32.mrf.mxu0
      %v1955 = vadd.f32 %v1891, %v1954
      %v1956 = vpop.f32.mrf.mxu0
      %v1957 = vadd.f32 %v1893, %v1956
      %1958 = vmatmul.bf16.gmra.mxu0 %v1932
      %v1959 = vpop.f32.mrf.mxu0
      %v1960 = vadd.f32 %v1896, %v1959
      %v1961 = vpop.f32.mrf.mxu0
      %v1962 = vadd.f32 %v1898, %v1961
      %1963 = vmatmul.bf16.gmra.mxu0 %v1935
      %v1964 = vpop.f32.mrf.mxu0
      %v1965 = vadd.f32 %v1901, %v1964
      %v1966 = vpop.f32.mrf.mxu0
      %v1967 = vadd.f32 %v1903, %v1966
      %1968 = vdwg.mxu0
      %v1969 = vld [vmem:[#allocation2] sm:$0xe]
      %v1970 = vld [vmem:[#allocation2 + $0x8] sm:$0xe]
      %v1971 = vld [vmem:[#allocation2 + $0x10] sm:$0xe]
      %v1972 = vld [vmem:[#allocation2 + $0x18] sm:$0xe]
      %v1973 = vld [vmem:[#allocation2 + $0x20] sm:$0xe]
      %v1974 = vld [vmem:[#allocation2 + $0x28] sm:$0xe]
      %v1975 = vld [vmem:[#allocation2 + $0x30] sm:$0xe]
      %v1976 = vld [vmem:[#allocation2 + $0x38] sm:$0xe]
      %vm1993 = vcmask 1042432
      %vm1994 = vcmask 1046532
      %vm1995 = vmor %vm1993, %vm1994
      %v1996 = vrot.slane %v1969, 5
      %v1997 = vrot.slane %v1996, 4
      %v1998 = vrot.slane %v1725, 5
      %v1999 = vsel %vm1995, %v1997, %v1998
      %v2000 = vrot.slane %v1970, 5
      %v2001 = vrot.slane %v2000, 4
      %v2002 = vrot.slane %v1726, 5
      %v2003 = vsel %vm1995, %v2001, %v2002
      %v2004 = vrot.slane %v1971, 5
      %v2005 = vrot.slane %v2004, 4
      %v2006 = vrot.slane %v1727, 5
      %v2007 = vsel %vm1995, %v2005, %v2006
      %v2008 = vrot.slane %v1972, 5
      %v2009 = vrot.slane %v2008, 4
      %v2010 = vrot.slane %v1728, 5
      %v2011 = vsel %vm1995, %v2009, %v2010
      %v2012 = vrot.slane %v1973, 5
      %v2013 = vrot.slane %v2012, 4
      %v2014 = vrot.slane %v1729, 5
      %v2015 = vsel %vm1995, %v2013, %v2014
      %v2016 = vrot.slane %v1974, 5
      %v2017 = vrot.slane %v2016, 4
      %v2018 = vrot.slane %v1730, 5
      %v2019 = vsel %vm1995, %v2017, %v2018
      %v2020 = vrot.slane %v1975, 5
      %v2021 = vrot.slane %v2020, 4
      %v2022 = vrot.slane %v1731, 5
      %v2023 = vsel %vm1995, %v2021, %v2022
      %v2024 = vrot.slane %v1976, 5
      %v2025 = vrot.slane %v2024, 4
      %v2026 = vrot.slane %v1732, 5
      %v2027 = vsel %vm1995, %v2025, %v2026
      %s2028 = scalar_lea.vmem %s6, 8
      %v2029 = vld [vmem:[%s2028] sm:$0xf]
      %v2030 = vunpack.c.l.b16 %v1999
      %v2031 = vunpack.c.l.b16 %v2003
      %v2032 = vunpack.c.l.b16 %v2007
      %v2033 = vunpack.c.l.b16 %v2011
      %v2034 = vunpack.c.l.b16 %v2015
      %v2035 = vunpack.c.l.b16 %v2019
      %v2036 = vunpack.c.l.b16 %v2023
      %v2037 = vunpack.c.l.b16 %v2027
      %v2038 = vpack.c.b16 %v2031, %v2030
      %v2039 = vpack.c.b16 %v2033, %v2032
      %v2040 = vpack.c.b16 %v2035, %v2034
      %v2041 = vpack.c.b16 %v2037, %v2036
      %v2043 = vsel %vm1859, %v2038, 0
      %v2046 = vsel %vm1859, %v2039, 0
      %v2049 = vsel %vm1859, %v2040, 0
      %v2052 = vsel %vm1859, %v2041, 0
      %v2055 = vsel %vm1872, %v2029, 0
      %2057 = vmatpush.bf16.msra.mxu0 0
      %2058 = vmatpush.bf16.msra.mxu0 0
      %2059 = vmatpush.bf16.msra.mxu0 0
      %2060 = vmatpush.bf16.msra.mxu0 0
      %2061 = vmatpush.bf16.msra.mxu0 0
      %2062 = vmatpush.bf16.msra.mxu0 0
      %2063 = vmatpush.bf16.msra.mxu0 0
      %2064 = vmatpush.bf16.msra.mxu0 %v2055
      %2065 = vmatmul.bf16.gmra.mxu0 %v2043
      %v2066 = vpop.f32.mrf.mxu0
      %v2067 = vadd.f32 0.0, %v2066
      %v2068 = vpop.f32.mrf.mxu0
      %v2069 = vadd.f32 0.0, %v2068
      %2070 = vmatmul.bf16.gmra.mxu0 %v2046
      %v2071 = vpop.f32.mrf.mxu0
      %v2072 = vadd.f32 0.0, %v2071
      %v2073 = vpop.f32.mrf.mxu0
      %v2074 = vadd.f32 0.0, %v2073
      %2075 = vmatmul.bf16.gmra.mxu0 %v2049
      %v2076 = vpop.f32.mrf.mxu0
      %v2077 = vadd.f32 0.0, %v2076
      %v2078 = vpop.f32.mrf.mxu0
      %v2079 = vadd.f32 0.0, %v2078
      %2080 = vmatmul.bf16.gmra.mxu0 %v2052
      %v2081 = vpop.f32.mrf.mxu0
      %v2082 = vadd.f32 0.0, %v2081
      %v2083 = vpop.f32.mrf.mxu0
      %v2084 = vadd.f32 0.0, %v2083
      %2085 = vdwg.mxu0
      %v2086 = vadd.f32 %v1950, %v2067
      %v2087 = vadd.f32 %v1952, %v2069
      %v2088 = vadd.f32 %v1955, %v2072
      %v2089 = vadd.f32 %v1957, %v2074
      %v2090 = vadd.f32 %v1960, %v2077
      %v2091 = vadd.f32 %v1962, %v2079
      %v2092 = vadd.f32 %v1965, %v2082
      %v2093 = vadd.f32 %v1967, %v2084
      %v2094 = vld [vmem:[%s1665] sm:$0xf]
      %v2095 = vld [vmem:[%s1665 + $0x8] sm:$0xf]
      %v2096 = vld [vmem:[%s1665 + $0x10] sm:$0xf]
      %v2097 = vld [vmem:[%s1665 + $0x18] sm:$0xf]
      %v2098 = vld [vmem:[%s1665 + $0x20] sm:$0xf]
      %v2099 = vld [vmem:[%s1665 + $0x28] sm:$0xf]
      %v2100 = vld [vmem:[%s1665 + $0x30] sm:$0xf]
      %v2101 = vld [vmem:[%s1665 + $0x38] sm:$0xf]
      %s2102 = scalar_lea.vmem %s6, 12
      %v2103 = vld [vmem:[%s2102] sm:$0xf]
      %v2112 = vunpack.c.l.b16 %v2094
      %v2113 = vunpack.c.l.b16 %v2095
      %v2114 = vunpack.c.l.b16 %v2096
      %v2115 = vunpack.c.l.b16 %v2097
      %v2116 = vunpack.c.l.b16 %v2098
      %v2117 = vunpack.c.l.b16 %v2099
      %v2118 = vunpack.c.l.b16 %v2100
      %v2119 = vunpack.c.l.b16 %v2101
      %v2120 = vpack.c.b16 %v2113, %v2112
      %v2121 = vpack.c.b16 %v2115, %v2114
      %v2122 = vpack.c.b16 %v2117, %v2116
      %v2123 = vpack.c.b16 %v2119, %v2118
      %v2125 = vsel %vm1859, %v2120, 0
      %v2128 = vsel %vm1859, %v2121, 0
      %v2131 = vsel %vm1859, %v2122, 0
      %v2134 = vsel %vm1859, %v2123, 0
      %v2137 = vsel %vm1872, %v2103, 0
      %2139 = vmatpush.bf16.msra.mxu0 0
      %2140 = vmatpush.bf16.msra.mxu0 0
      %2141 = vmatpush.bf16.msra.mxu0 0
      %2142 = vmatpush.bf16.msra.mxu0 0
      %2143 = vmatpush.bf16.msra.mxu0 0
      %2144 = vmatpush.bf16.msra.mxu0 0
      %2145 = vmatpush.bf16.msra.mxu0 0
      %2146 = vmatpush.bf16.msra.mxu0 %v2137
      %2147 = vmatmul.bf16.gmra.mxu0 %v2125
      %v2148 = vpop.f32.mrf.mxu0
      %v2149 = vadd.f32 0.0, %v2148
      %v2150 = vpop.f32.mrf.mxu0
      %v2151 = vadd.f32 0.0, %v2150
      %2152 = vmatmul.bf16.gmra.mxu0 %v2128
      %v2153 = vpop.f32.mrf.mxu0
      %v2154 = vadd.f32 0.0, %v2153
      %v2155 = vpop.f32.mrf.mxu0
      %v2156 = vadd.f32 0.0, %v2155
      %2157 = vmatmul.bf16.gmra.mxu0 %v2131
      %v2158 = vpop.f32.mrf.mxu0
      %v2159 = vadd.f32 0.0, %v2158
      %v2160 = vpop.f32.mrf.mxu0
      %v2161 = vadd.f32 0.0, %v2160
      %2162 = vmatmul.bf16.gmra.mxu0 %v2134
      %v2163 = vpop.f32.mrf.mxu0
      %v2164 = vadd.f32 0.0, %v2163
      %v2165 = vpop.f32.mrf.mxu0
      %v2166 = vadd.f32 0.0, %v2165
      %2167 = vdwg.mxu0
      %v2168 = vadd.f32 %v2086, %v2149
      %v2169 = vadd.f32 %v2087, %v2151
      %v2170 = vadd.f32 %v2088, %v2154
      %v2171 = vadd.f32 %v2089, %v2156
      %v2172 = vadd.f32 %v2090, %v2159
      %v2173 = vadd.f32 %v2091, %v2161
      %v2174 = vadd.f32 %v2092, %v2164
      %v2175 = vadd.f32 %v2093, %v2166
      %v2176 = vld [vmem:[%s1665] sm:$0xf]
      %v2177 = vld [vmem:[%s1665 + $0x4] sm:$0x1]
      %v2178 = vld [vmem:[%s1665 + $0x8] sm:$0xf]
      %v2179 = vld [vmem:[%s1665 + $0xc] sm:$0x1]
      %v2180 = vld [vmem:[%s1665 + $0x10] sm:$0xf]
      %v2181 = vld [vmem:[%s1665 + $0x14] sm:$0x1]
      %v2182 = vld [vmem:[%s1665 + $0x18] sm:$0xf]
      %v2183 = vld [vmem:[%s1665 + $0x1c] sm:$0x1]
      %v2184 = vld [vmem:[%s1665 + $0x20] sm:$0xf]
      %v2185 = vld [vmem:[%s1665 + $0x24] sm:$0x1]
      %v2186 = vld [vmem:[%s1665 + $0x28] sm:$0xf]
      %v2187 = vld [vmem:[%s1665 + $0x2c] sm:$0x1]
      %v2188 = vld [vmem:[%s1665 + $0x30] sm:$0xf]
      %v2189 = vld [vmem:[%s1665 + $0x34] sm:$0x1]
      %v2190 = vld [vmem:[%s1665 + $0x38] sm:$0xf]
      %v2191 = vld [vmem:[%s1665 + $0x3c] sm:$0x1]
      %v2193 = vshrl.u32 %v2176, 16
      %v2195 = vrot.slane %v2193, 4
      %v2196 = vshll.u32 %v2176, 16
      %v2198 = vrot.slane %v2196, 5
      %v2199 = vor.u32 %v2195, %v2198
      %v2200 = vrot.slane %v2199, 4
      %v2202 = vshll.u32 %v2177, 16
      %v2204 = vrot.slane %v2202, 5
      %v2205 = vsel %vm588, %v2200, %v2204
      %v2207 = vshrl.u32 %v2178, 16
      %v2209 = vrot.slane %v2207, 4
      %v2210 = vshll.u32 %v2178, 16
      %v2212 = vrot.slane %v2210, 5
      %v2213 = vor.u32 %v2209, %v2212
      %v2214 = vrot.slane %v2213, 4
      %v2216 = vshll.u32 %v2179, 16
      %v2218 = vrot.slane %v2216, 5
      %v2219 = vsel %vm588, %v2214, %v2218
      %v2221 = vshrl.u32 %v2180, 16
      %v2223 = vrot.slane %v2221, 4
      %v2224 = vshll.u32 %v2180, 16
      %v2226 = vrot.slane %v2224, 5
      %v2227 = vor.u32 %v2223, %v2226
      %v2228 = vrot.slane %v2227, 4
      %v2230 = vshll.u32 %v2181, 16
      %v2232 = vrot.slane %v2230, 5
      %v2233 = vsel %vm588, %v2228, %v2232
      %v2235 = vshrl.u32 %v2182, 16
      %v2237 = vrot.slane %v2235, 4
      %v2238 = vshll.u32 %v2182, 16
      %v2240 = vrot.slane %v2238, 5
      %v2241 = vor.u32 %v2237, %v2240
      %v2242 = vrot.slane %v2241, 4
      %v2244 = vshll.u32 %v2183, 16
      %v2246 = vrot.slane %v2244, 5
      %v2247 = vsel %vm588, %v2242, %v2246
      %v2249 = vshrl.u32 %v2184, 16
      %v2251 = vrot.slane %v2249, 4
      %v2252 = vshll.u32 %v2184, 16
      %v2254 = vrot.slane %v2252, 5
      %v2255 = vor.u32 %v2251, %v2254
      %v2256 = vrot.slane %v2255, 4
      %v2258 = vshll.u32 %v2185, 16
      %v2260 = vrot.slane %v2258, 5
      %v2261 = vsel %vm588, %v2256, %v2260
      %v2263 = vshrl.u32 %v2186, 16
      %v2265 = vrot.slane %v2263, 4
      %v2266 = vshll.u32 %v2186, 16
      %v2268 = vrot.slane %v2266, 5
      %v2269 = vor.u32 %v2265, %v2268
      %v2270 = vrot.slane %v2269, 4
      %v2272 = vshll.u32 %v2187, 16
      %v2274 = vrot.slane %v2272, 5
      %v2275 = vsel %vm588, %v2270, %v2274
      %v2277 = vshrl.u32 %v2188, 16
      %v2279 = vrot.slane %v2277, 4
      %v2280 = vshll.u32 %v2188, 16
      %v2282 = vrot.slane %v2280, 5
      %v2283 = vor.u32 %v2279, %v2282
      %v2284 = vrot.slane %v2283, 4
      %v2286 = vshll.u32 %v2189, 16
      %v2288 = vrot.slane %v2286, 5
      %v2289 = vsel %vm588, %v2284, %v2288
      %v2291 = vshrl.u32 %v2190, 16
      %v2293 = vrot.slane %v2291, 4
      %v2294 = vshll.u32 %v2190, 16
      %v2296 = vrot.slane %v2294, 5
      %v2297 = vor.u32 %v2293, %v2296
      %v2298 = vrot.slane %v2297, 4
      %v2300 = vshll.u32 %v2191, 16
      %v2302 = vrot.slane %v2300, 5
      %v2303 = vsel %vm588, %v2298, %v2302
      %s2304 = scalar_lea.vmem %s6, 16
      %v2305 = vld [vmem:[%s2304] sm:$0xf]
      %v2306 = vunpack.c.l.b16 %v2205
      %v2307 = vunpack.c.l.b16 %v2219
      %v2308 = vunpack.c.l.b16 %v2233
      %v2309 = vunpack.c.l.b16 %v2247
      %v2310 = vunpack.c.l.b16 %v2261
      %v2311 = vunpack.c.l.b16 %v2275
      %v2312 = vunpack.c.l.b16 %v2289
      %v2313 = vunpack.c.l.b16 %v2303
      %v2314 = vpack.c.b16 %v2307, %v2306
      %v2315 = vpack.c.b16 %v2309, %v2308
      %v2316 = vpack.c.b16 %v2311, %v2310
      %v2317 = vpack.c.b16 %v2313, %v2312
      %v2319 = vsel %vm1859, %v2314, 0
      %v2322 = vsel %vm1859, %v2315, 0
      %v2325 = vsel %vm1859, %v2316, 0
      %v2328 = vsel %vm1859, %v2317, 0
      %v2331 = vsel %vm1872, %v2305, 0
      %2333 = vmatpush.bf16.msra.mxu0 0
      %2334 = vmatpush.bf16.msra.mxu0 0
      %2335 = vmatpush.bf16.msra.mxu0 0
      %2336 = vmatpush.bf16.msra.mxu0 0
      %2337 = vmatpush.bf16.msra.mxu0 0
      %2338 = vmatpush.bf16.msra.mxu0 0
      %2339 = vmatpush.bf16.msra.mxu0 0
      %2340 = vmatpush.bf16.msra.mxu0 %v2331
      %2341 = vmatmul.bf16.gmra.mxu0 %v2319
      %v2342 = vpop.f32.mrf.mxu0
      %v2343 = vadd.f32 0.0, %v2342
      %v2344 = vpop.f32.mrf.mxu0
      %v2345 = vadd.f32 0.0, %v2344
      %2346 = vmatmul.bf16.gmra.mxu0 %v2322
      %v2347 = vpop.f32.mrf.mxu0
      %v2348 = vadd.f32 0.0, %v2347
      %v2349 = vpop.f32.mrf.mxu0
      %v2350 = vadd.f32 0.0, %v2349
      %2351 = vmatmul.bf16.gmra.mxu0 %v2325
      %v2352 = vpop.f32.mrf.mxu0
      %v2353 = vadd.f32 0.0, %v2352
      %v2354 = vpop.f32.mrf.mxu0
      %v2355 = vadd.f32 0.0, %v2354
      %2356 = vmatmul.bf16.gmra.mxu0 %v2328
      %v2357 = vpop.f32.mrf.mxu0
      %v2358 = vadd.f32 0.0, %v2357
      %v2359 = vpop.f32.mrf.mxu0
      %v2360 = vadd.f32 0.0, %v2359
      %2361 = vdwg.mxu0
      %v2362 = vadd.f32 %v2168, %v2343
      %v2363 = vadd.f32 %v2169, %v2345
      %v2364 = vadd.f32 %v2170, %v2348
      %v2365 = vadd.f32 %v2171, %v2350
      %v2366 = vadd.f32 %v2172, %v2353
      %v2367 = vadd.f32 %v2173, %v2355
      %v2368 = vadd.f32 %v2174, %v2358
      %v2369 = vadd.f32 %v2175, %v2360
      %v2370 = vld [vmem:[%s1665] sm:$0xe]
      %v2371 = vld [vmem:[%s1665 + $0x8] sm:$0xe]
      %v2372 = vld [vmem:[%s1665 + $0x10] sm:$0xe]
      %v2373 = vld [vmem:[%s1665 + $0x18] sm:$0xe]
      %v2374 = vld [vmem:[%s1665 + $0x20] sm:$0xe]
      %v2375 = vld [vmem:[%s1665 + $0x28] sm:$0xe]
      %v2376 = vld [vmem:[%s1665 + $0x30] sm:$0xe]
      %v2377 = vld [vmem:[%s1665 + $0x38] sm:$0xe]
      %v2394 = vrot.slane %v2370, 5
      %v2395 = vrot.slane %v2394, 4
      %v2396 = vrot.slane %v2177, 5
      %v2397 = vsel %vm1995, %v2395, %v2396
      %v2398 = vrot.slane %v2371, 5
      %v2399 = vrot.slane %v2398, 4
      %v2400 = vrot.slane %v2179, 5
      %v2401 = vsel %vm1995, %v2399, %v2400
      %v2402 = vrot.slane %v2372, 5
      %v2403 = vrot.slane %v2402, 4
      %v2404 = vrot.slane %v2181, 5
      %v2405 = vsel %vm1995, %v2403, %v2404
      %v2406 = vrot.slane %v2373, 5
      %v2407 = vrot.slane %v2406, 4
      %v2408 = vrot.slane %v2183, 5
      %v2409 = vsel %vm1995, %v2407, %v2408
      %v2410 = vrot.slane %v2374, 5
      %v2411 = vrot.slane %v2410, 4
      %v2412 = vrot.slane %v2185, 5
      %v2413 = vsel %vm1995, %v2411, %v2412
      %v2414 = vrot.slane %v2375, 5
      %v2415 = vrot.slane %v2414, 4
      %v2416 = vrot.slane %v2187, 5
      %v2417 = vsel %vm1995, %v2415, %v2416
      %v2418 = vrot.slane %v2376, 5
      %v2419 = vrot.slane %v2418, 4
      %v2420 = vrot.slane %v2189, 5
      %v2421 = vsel %vm1995, %v2419, %v2420
      %v2422 = vrot.slane %v2377, 5
      %v2423 = vrot.slane %v2422, 4
      %v2424 = vrot.slane %v2191, 5
      %v2425 = vsel %vm1995, %v2423, %v2424
      %s2426 = scalar_lea.vmem %s6, 20
      %v2427 = vld [vmem:[%s2426] sm:$0xf]
      %v2428 = vunpack.c.l.b16 %v2397
      %v2429 = vunpack.c.l.b16 %v2401
      %v2430 = vunpack.c.l.b16 %v2405
      %v2431 = vunpack.c.l.b16 %v2409
      %v2432 = vunpack.c.l.b16 %v2413
      %v2433 = vunpack.c.l.b16 %v2417
      %v2434 = vunpack.c.l.b16 %v2421
      %v2435 = vunpack.c.l.b16 %v2425
      %v2436 = vpack.c.b16 %v2429, %v2428
      %v2437 = vpack.c.b16 %v2431, %v2430
      %v2438 = vpack.c.b16 %v2433, %v2432
      %v2439 = vpack.c.b16 %v2435, %v2434
      %v2441 = vsel %vm1859, %v2436, 0
      %v2444 = vsel %vm1859, %v2437, 0
      %v2447 = vsel %vm1859, %v2438, 0
      %v2450 = vsel %vm1859, %v2439, 0
      %v2453 = vsel %vm1872, %v2427, 0
      %2455 = vmatpush.bf16.msra.mxu0 0
      %2456 = vmatpush.bf16.msra.mxu0 0
      %2457 = vmatpush.bf16.msra.mxu0 0
      %2458 = vmatpush.bf16.msra.mxu0 0
      %2459 = vmatpush.bf16.msra.mxu0 0
      %2460 = vmatpush.bf16.msra.mxu0 0
      %2461 = vmatpush.bf16.msra.mxu0 0
      %2462 = vmatpush.bf16.msra.mxu0 %v2453
      %2463 = vmatmul.bf16.gmra.mxu0 %v2441
      %v2464 = vpop.f32.mrf.mxu0
      %v2465 = vadd.f32 0.0, %v2464
      %v2466 = vpop.f32.mrf.mxu0
      %v2467 = vadd.f32 0.0, %v2466
      %2468 = vmatmul.bf16.gmra.mxu0 %v2444
      %v2469 = vpop.f32.mrf.mxu0
      %v2470 = vadd.f32 0.0, %v2469
      %v2471 = vpop.f32.mrf.mxu0
      %v2472 = vadd.f32 0.0, %v2471
      %2473 = vmatmul.bf16.gmra.mxu0 %v2447
      %v2474 = vpop.f32.mrf.mxu0
      %v2475 = vadd.f32 0.0, %v2474
      %v2476 = vpop.f32.mrf.mxu0
      %v2477 = vadd.f32 0.0, %v2476
      %2478 = vmatmul.bf16.gmra.mxu0 %v2450
      %v2479 = vpop.f32.mrf.mxu0
      %v2480 = vadd.f32 0.0, %v2479
      %v2481 = vpop.f32.mrf.mxu0
      %v2482 = vadd.f32 0.0, %v2481
      %2483 = vdwg.mxu0
      %v2484 = vadd.f32 %v2362, %v2465
      %v2485 = vadd.f32 %v2363, %v2467
      %v2486 = vadd.f32 %v2364, %v2470
      %v2487 = vadd.f32 %v2365, %v2472
      %v2488 = vadd.f32 %v2366, %v2475
      %v2489 = vadd.f32 %v2367, %v2477
      %v2490 = vadd.f32 %v2368, %v2480
      %v2491 = vadd.f32 %v2369, %v2482
      %s2492 = scalar_lea.vmem [#allocation2], 16
      %v2493 = vld [vmem:[%s2492] sm:$0xf]
      %v2494 = vld [vmem:[%s2492 + $0x8] sm:$0xf]
      %v2495 = vld [vmem:[%s2492 + $0x10] sm:$0xf]
      %v2496 = vld [vmem:[%s2492 + $0x18] sm:$0xf]
      %v2497 = vld [vmem:[%s2492 + $0x20] sm:$0xf]
      %v2498 = vld [vmem:[%s2492 + $0x28] sm:$0xf]
      %v2499 = vld [vmem:[%s2492 + $0x30] sm:$0xf]
      %v2500 = vld [vmem:[%s2492 + $0x38] sm:$0xf]
      %s2501 = scalar_lea.vmem %s6, 24
      %v2502 = vld [vmem:[%s2501] sm:$0xf]
      %v2511 = vunpack.c.l.b16 %v2493
      %v2512 = vunpack.c.l.b16 %v2494
      %v2513 = vunpack.c.l.b16 %v2495
      %v2514 = vunpack.c.l.b16 %v2496
      %v2515 = vunpack.c.l.b16 %v2497
      %v2516 = vunpack.c.l.b16 %v2498
      %v2517 = vunpack.c.l.b16 %v2499
      %v2518 = vunpack.c.l.b16 %v2500
      %v2519 = vpack.c.b16 %v2512, %v2511
      %v2520 = vpack.c.b16 %v2514, %v2513
      %v2521 = vpack.c.b16 %v2516, %v2515
      %v2522 = vpack.c.b16 %v2518, %v2517
      %v2524 = vsel %vm1859, %v2519, 0
      %v2527 = vsel %vm1859, %v2520, 0
      %v2530 = vsel %vm1859, %v2521, 0
      %v2533 = vsel %vm1859, %v2522, 0
      %v2536 = vsel %vm1872, %v2502, 0
      %2538 = vmatpush.bf16.msra.mxu0 0
      %2539 = vmatpush.bf16.msra.mxu0 0
      %2540 = vmatpush.bf16.msra.mxu0 0
      %2541 = vmatpush.bf16.msra.mxu0 0
      %2542 = vmatpush.bf16.msra.mxu0 0
      %2543 = vmatpush.bf16.msra.mxu0 0
      %2544 = vmatpush.bf16.msra.mxu0 0
      %2545 = vmatpush.bf16.msra.mxu0 %v2536
      %2546 = vmatmul.bf16.gmra.mxu0 %v2524
      %v2547 = vpop.f32.mrf.mxu0
      %v2548 = vadd.f32 0.0, %v2547
      %v2549 = vpop.f32.mrf.mxu0
      %v2550 = vadd.f32 0.0, %v2549
      %2551 = vmatmul.bf16.gmra.mxu0 %v2527
      %v2552 = vpop.f32.mrf.mxu0
      %v2553 = vadd.f32 0.0, %v2552
      %v2554 = vpop.f32.mrf.mxu0
      %v2555 = vadd.f32 0.0, %v2554
      %2556 = vmatmul.bf16.gmra.mxu0 %v2530
      %v2557 = vpop.f32.mrf.mxu0
      %v2558 = vadd.f32 0.0, %v2557
      %v2559 = vpop.f32.mrf.mxu0
      %v2560 = vadd.f32 0.0, %v2559
      %2561 = vmatmul.bf16.gmra.mxu0 %v2533
      %v2562 = vpop.f32.mrf.mxu0
      %v2563 = vadd.f32 0.0, %v2562
      %v2564 = vpop.f32.mrf.mxu0
      %v2565 = vadd.f32 0.0, %v2564
      %2566 = vdwg.mxu0
      %v2567 = vadd.f32 %v2484, %v2548
      %v2568 = vadd.f32 %v2485, %v2550
      %v2569 = vadd.f32 %v2486, %v2553
      %v2570 = vadd.f32 %v2487, %v2555
      %v2571 = vadd.f32 %v2488, %v2558
      %v2572 = vadd.f32 %v2489, %v2560
      %v2573 = vadd.f32 %v2490, %v2563
      %v2574 = vadd.f32 %v2491, %v2565
      %v2575 = vld [vmem:[%s2492] sm:$0xf]
      %v2576 = vld [vmem:[%s2492 + $0x4] sm:$0x1]
      %v2577 = vld [vmem:[%s2492 + $0x8] sm:$0xf]
      %v2578 = vld [vmem:[%s2492 + $0xc] sm:$0x1]
      %v2579 = vld [vmem:[%s2492 + $0x10] sm:$0xf]
      %v2580 = vld [vmem:[%s2492 + $0x14] sm:$0x1]
      %v2581 = vld [vmem:[%s2492 + $0x18] sm:$0xf]
      %v2582 = vld [vmem:[%s2492 + $0x1c] sm:$0x1]
      %v2583 = vld [vmem:[%s2492 + $0x20] sm:$0xf]
      %v2584 = vld [vmem:[%s2492 + $0x24] sm:$0x1]
      %v2585 = vld [vmem:[%s2492 + $0x28] sm:$0xf]
      %v2586 = vld [vmem:[%s2492 + $0x2c] sm:$0x1]
      %v2587 = vld [vmem:[%s2492 + $0x30] sm:$0xf]
      %v2588 = vld [vmem:[%s2492 + $0x34] sm:$0x1]
      %v2589 = vld [vmem:[%s2492 + $0x38] sm:$0xf]
      %v2590 = vld [vmem:[%s2492 + $0x3c] sm:$0x1]
      %v2592 = vshrl.u32 %v2575, 16
      %v2594 = vrot.slane %v2592, 4
      %v2595 = vshll.u32 %v2575, 16
      %v2597 = vrot.slane %v2595, 5
      %v2598 = vor.u32 %v2594, %v2597
      %v2599 = vrot.slane %v2598, 4
      %v2601 = vshll.u32 %v2576, 16
      %v2603 = vrot.slane %v2601, 5
      %v2604 = vsel %vm588, %v2599, %v2603
      %v2606 = vshrl.u32 %v2577, 16
      %v2608 = vrot.slane %v2606, 4
      %v2609 = vshll.u32 %v2577, 16
      %v2611 = vrot.slane %v2609, 5
      %v2612 = vor.u32 %v2608, %v2611
      %v2613 = vrot.slane %v2612, 4
      %v2615 = vshll.u32 %v2578, 16
      %v2617 = vrot.slane %v2615, 5
      %v2618 = vsel %vm588, %v2613, %v2617
      %v2620 = vshrl.u32 %v2579, 16
      %v2622 = vrot.slane %v2620, 4
      %v2623 = vshll.u32 %v2579, 16
      %v2625 = vrot.slane %v2623, 5
      %v2626 = vor.u32 %v2622, %v2625
      %v2627 = vrot.slane %v2626, 4
      %v2629 = vshll.u32 %v2580, 16
      %v2631 = vrot.slane %v2629, 5
      %v2632 = vsel %vm588, %v2627, %v2631
      %v2634 = vshrl.u32 %v2581, 16
      %v2636 = vrot.slane %v2634, 4
      %v2637 = vshll.u32 %v2581, 16
      %v2639 = vrot.slane %v2637, 5
      %v2640 = vor.u32 %v2636, %v2639
      %v2641 = vrot.slane %v2640, 4
      %v2643 = vshll.u32 %v2582, 16
      %v2645 = vrot.slane %v2643, 5
      %v2646 = vsel %vm588, %v2641, %v2645
      %v2648 = vshrl.u32 %v2583, 16
      %v2650 = vrot.slane %v2648, 4
      %v2651 = vshll.u32 %v2583, 16
      %v2653 = vrot.slane %v2651, 5
      %v2654 = vor.u32 %v2650, %v2653
      %v2655 = vrot.slane %v2654, 4
      %v2657 = vshll.u32 %v2584, 16
      %v2659 = vrot.slane %v2657, 5
      %v2660 = vsel %vm588, %v2655, %v2659
      %v2662 = vshrl.u32 %v2585, 16
      %v2664 = vrot.slane %v2662, 4
      %v2665 = vshll.u32 %v2585, 16
      %v2667 = vrot.slane %v2665, 5
      %v2668 = vor.u32 %v2664, %v2667
      %v2669 = vrot.slane %v2668, 4
      %v2671 = vshll.u32 %v2586, 16
      %v2673 = vrot.slane %v2671, 5
      %v2674 = vsel %vm588, %v2669, %v2673
      %v2676 = vshrl.u32 %v2587, 16
      %v2678 = vrot.slane %v2676, 4
      %v2679 = vshll.u32 %v2587, 16
      %v2681 = vrot.slane %v2679, 5
      %v2682 = vor.u32 %v2678, %v2681
      %v2683 = vrot.slane %v2682, 4
      %v2685 = vshll.u32 %v2588, 16
      %v2687 = vrot.slane %v2685, 5
      %v2688 = vsel %vm588, %v2683, %v2687
      %v2690 = vshrl.u32 %v2589, 16
      %v2692 = vrot.slane %v2690, 4
      %v2693 = vshll.u32 %v2589, 16
      %v2695 = vrot.slane %v2693, 5
      %v2696 = vor.u32 %v2692, %v2695
      %v2697 = vrot.slane %v2696, 4
      %v2699 = vshll.u32 %v2590, 16
      %v2701 = vrot.slane %v2699, 5
      %v2702 = vsel %vm588, %v2697, %v2701
      %s2703 = scalar_lea.vmem %s6, 28
      %v2704 = vld [vmem:[%s2703] sm:$0xf]
      %v2705 = vunpack.c.l.b16 %v2604
      %v2706 = vunpack.c.l.b16 %v2618
      %v2707 = vunpack.c.l.b16 %v2632
      %v2708 = vunpack.c.l.b16 %v2646
      %v2709 = vunpack.c.l.b16 %v2660
      %v2710 = vunpack.c.l.b16 %v2674
      %v2711 = vunpack.c.l.b16 %v2688
      %v2712 = vunpack.c.l.b16 %v2702
      %v2713 = vpack.c.b16 %v2706, %v2705
      %v2714 = vpack.c.b16 %v2708, %v2707
      %v2715 = vpack.c.b16 %v2710, %v2709
      %v2716 = vpack.c.b16 %v2712, %v2711
      %v2718 = vsel %vm1859, %v2713, 0
      %v2721 = vsel %vm1859, %v2714, 0
      %v2724 = vsel %vm1859, %v2715, 0
      %v2727 = vsel %vm1859, %v2716, 0
      %v2730 = vsel %vm1872, %v2704, 0
      %2732 = vmatpush.bf16.msra.mxu0 0
      %2733 = vmatpush.bf16.msra.mxu0 0
      %2734 = vmatpush.bf16.msra.mxu0 0
      %2735 = vmatpush.bf16.msra.mxu0 0
      %2736 = vmatpush.bf16.msra.mxu0 0
      %2737 = vmatpush.bf16.msra.mxu0 0
      %2738 = vmatpush.bf16.msra.mxu0 0
      %2739 = vmatpush.bf16.msra.mxu0 %v2730
      %2740 = vmatmul.bf16.gmra.mxu0 %v2718
      %v2741 = vpop.f32.mrf.mxu0
      %v2742 = vadd.f32 0.0, %v2741
      %v2743 = vpop.f32.mrf.mxu0
      %v2744 = vadd.f32 0.0, %v2743
      %2745 = vmatmul.bf16.gmra.mxu0 %v2721
      %v2746 = vpop.f32.mrf.mxu0
      %v2747 = vadd.f32 0.0, %v2746
      %v2748 = vpop.f32.mrf.mxu0
      %v2749 = vadd.f32 0.0, %v2748
      %2750 = vmatmul.bf16.gmra.mxu0 %v2724
      %v2751 = vpop.f32.mrf.mxu0
      %v2752 = vadd.f32 0.0, %v2751
      %v2753 = vpop.f32.mrf.mxu0
      %v2754 = vadd.f32 0.0, %v2753
      %2755 = vmatmul.bf16.gmra.mxu0 %v2727
      %v2756 = vpop.f32.mrf.mxu0
      %v2757 = vadd.f32 0.0, %v2756
      %v2758 = vpop.f32.mrf.mxu0
      %v2759 = vadd.f32 0.0, %v2758
      %2760 = vdwg.mxu0
      %v2761 = vadd.f32 %v2567, %v2742
      %v2762 = vadd.f32 %v2568, %v2744
      %v2763 = vadd.f32 %v2569, %v2747
      %v2764 = vadd.f32 %v2570, %v2749
      %v2765 = vadd.f32 %v2571, %v2752
      %v2766 = vadd.f32 %v2572, %v2754
      %v2767 = vadd.f32 %v2573, %v2757
      %v2768 = vadd.f32 %v2574, %v2759
      %v2769 = vld [vmem:[%s2492] sm:$0xe]
      %v2770 = vld [vmem:[%s2492 + $0x8] sm:$0xe]
      %v2771 = vld [vmem:[%s2492 + $0x10] sm:$0xe]
      %v2772 = vld [vmem:[%s2492 + $0x18] sm:$0xe]
      %v2773 = vld [vmem:[%s2492 + $0x20] sm:$0xe]
      %v2774 = vld [vmem:[%s2492 + $0x28] sm:$0xe]
      %v2775 = vld [vmem:[%s2492 + $0x30] sm:$0xe]
      %v2776 = vld [vmem:[%s2492 + $0x38] sm:$0xe]
      %v2793 = vrot.slane %v2769, 5
      %v2794 = vrot.slane %v2793, 4
      %v2795 = vrot.slane %v2576, 5
      %v2796 = vsel %vm1995, %v2794, %v2795
      %v2797 = vrot.slane %v2770, 5
      %v2798 = vrot.slane %v2797, 4
      %v2799 = vrot.slane %v2578, 5
      %v2800 = vsel %vm1995, %v2798, %v2799
      %v2801 = vrot.slane %v2771, 5
      %v2802 = vrot.slane %v2801, 4
      %v2803 = vrot.slane %v2580, 5
      %v2804 = vsel %vm1995, %v2802, %v2803
      %v2805 = vrot.slane %v2772, 5
      %v2806 = vrot.slane %v2805, 4
      %v2807 = vrot.slane %v2582, 5
      %v2808 = vsel %vm1995, %v2806, %v2807
      %v2809 = vrot.slane %v2773, 5
      %v2810 = vrot.slane %v2809, 4
      %v2811 = vrot.slane %v2584, 5
      %v2812 = vsel %vm1995, %v2810, %v2811
      %v2813 = vrot.slane %v2774, 5
      %v2814 = vrot.slane %v2813, 4
      %v2815 = vrot.slane %v2586, 5
      %v2816 = vsel %vm1995, %v2814, %v2815
      %v2817 = vrot.slane %v2775, 5
      %v2818 = vrot.slane %v2817, 4
      %v2819 = vrot.slane %v2588, 5
      %v2820 = vsel %vm1995, %v2818, %v2819
      %v2821 = vrot.slane %v2776, 5
      %v2822 = vrot.slane %v2821, 4
      %v2823 = vrot.slane %v2590, 5
      %v2824 = vsel %vm1995, %v2822, %v2823
      %s2825 = scalar_lea.vmem %s6, 32
      %v2826 = vld [vmem:[%s2825] sm:$0xf]
      %v2827 = vunpack.c.l.b16 %v2796
      %v2828 = vunpack.c.l.b16 %v2800
      %v2829 = vunpack.c.l.b16 %v2804
      %v2830 = vunpack.c.l.b16 %v2808
      %v2831 = vunpack.c.l.b16 %v2812
      %v2832 = vunpack.c.l.b16 %v2816
      %v2833 = vunpack.c.l.b16 %v2820
      %v2834 = vunpack.c.l.b16 %v2824
      %v2835 = vpack.c.b16 %v2828, %v2827
      %v2836 = vpack.c.b16 %v2830, %v2829
      %v2837 = vpack.c.b16 %v2832, %v2831
      %v2838 = vpack.c.b16 %v2834, %v2833
      %v2840 = vsel %vm1859, %v2835, 0
      %v2843 = vsel %vm1859, %v2836, 0
      %v2846 = vsel %vm1859, %v2837, 0
      %v2849 = vsel %vm1859, %v2838, 0
      %v2852 = vsel %vm1872, %v2826, 0
      %2854 = vmatpush.bf16.msra.mxu0 0
      %2855 = vmatpush.bf16.msra.mxu0 0
      %2856 = vmatpush.bf16.msra.mxu0 0
      %2857 = vmatpush.bf16.msra.mxu0 0
      %2858 = vmatpush.bf16.msra.mxu0 0
      %2859 = vmatpush.bf16.msra.mxu0 0
      %2860 = vmatpush.bf16.msra.mxu0 0
      %2861 = vmatpush.bf16.msra.mxu0 %v2852
      %2862 = vmatmul.bf16.gmra.mxu0 %v2840
      %v2863 = vpop.f32.mrf.mxu0
      %v2864 = vadd.f32 0.0, %v2863
      %v2865 = vpop.f32.mrf.mxu0
      %v2866 = vadd.f32 0.0, %v2865
      %2867 = vmatmul.bf16.gmra.mxu0 %v2843
      %v2868 = vpop.f32.mrf.mxu0
      %v2869 = vadd.f32 0.0, %v2868
      %v2870 = vpop.f32.mrf.mxu0
      %v2871 = vadd.f32 0.0, %v2870
      %2872 = vmatmul.bf16.gmra.mxu0 %v2846
      %v2873 = vpop.f32.mrf.mxu0
      %v2874 = vadd.f32 0.0, %v2873
      %v2875 = vpop.f32.mrf.mxu0
      %v2876 = vadd.f32 0.0, %v2875
      %2877 = vmatmul.bf16.gmra.mxu0 %v2849
      %v2878 = vpop.f32.mrf.mxu0
      %v2879 = vadd.f32 0.0, %v2878
      %v2880 = vpop.f32.mrf.mxu0
      %v2881 = vadd.f32 0.0, %v2880
      %2882 = vdwg.mxu0
      %v2883 = vadd.f32 %v2761, %v2864
      %v2884 = vadd.f32 %v2762, %v2866
      %v2885 = vadd.f32 %v2763, %v2869
      %v2886 = vadd.f32 %v2764, %v2871
      %v2887 = vadd.f32 %v2765, %v2874
      %v2888 = vadd.f32 %v2766, %v2876
      %v2889 = vadd.f32 %v2767, %v2879
      %v2890 = vadd.f32 %v2768, %v2881
      %v2891 = vld [vmem:[%s7] sm:$0x1]
      %v2893 = vperm.slane %v2891, 0
      %v2895 = vadd.f32 %v2883, %v2893
      %v2896 = vadd.f32 %v2884, %v2893
      %v2897 = vadd.f32 %v2885, %v2893
      %v2898 = vadd.f32 %v2886, %v2893
      %v2899 = vadd.f32 %v2887, %v2893
      %v2900 = vadd.f32 %v2888, %v2893
      %v2901 = vadd.f32 %v2889, %v2893
      %v2902 = vadd.f32 %v2890, %v2893
      %v2903 = vld [vmem:[%s414] sm:$0xf]
      %v2904 = vld [vmem:[%s414 + $0x8] sm:$0xf]
      %v2905 = vld [vmem:[%s414 + $0x10] sm:$0xf]
      %v2906 = vld [vmem:[%s414 + $0x18] sm:$0xf]
      %v2907 = vld [vmem:[%s414 + $0x20] sm:$0xf]
      %v2908 = vld [vmem:[%s414 + $0x28] sm:$0xf]
      %v2909 = vld [vmem:[%s414 + $0x30] sm:$0xf]
      %v2910 = vld [vmem:[%s414 + $0x38] sm:$0xf]
      %v2911 = vld [vmem:[%s8] sm:$0x3]
      %v2912 = vld [vmem:[%s9] sm:$0x1]
      %v2914 = vperm.slane %v2912, 0
      %v2924 = vunpack.c.l.b16 %v2903
      %v2925 = vunpack.c.l.b16 %v2904
      %v2926 = vunpack.c.l.b16 %v2905
      %v2927 = vunpack.c.l.b16 %v2906
      %v2928 = vunpack.c.l.b16 %v2907
      %v2929 = vunpack.c.l.b16 %v2908
      %v2930 = vunpack.c.l.b16 %v2909
      %v2931 = vunpack.c.l.b16 %v2910
      %v2932 = vpack.c.b16 %v2925, %v2924
      %v2933 = vpack.c.b16 %v2927, %v2926
      %v2934 = vpack.c.b16 %v2929, %v2928
      %v2935 = vpack.c.b16 %v2931, %v2930
      %v2937 = vsel %vm460, %v2932, 0
      %v2940 = vsel %vm460, %v2933, 0
      %v2943 = vsel %vm460, %v2934, 0
      %v2946 = vsel %vm460, %v2935, 0
      %v2949 = vsel %vm473, %v2911, 0
      %2951 = vmatpush.bf16.msra.mxu0 0
      %2952 = vmatpush.bf16.msra.mxu0 0
      %2953 = vmatpush.bf16.msra.mxu0 0
      %2954 = vmatpush.bf16.msra.mxu0 0
      %2955 = vmatpush.bf16.msra.mxu0 0
      %2956 = vmatpush.bf16.msra.mxu0 0
      %2957 = vmatpush.bf16.msra.mxu0 0
      %2958 = vmatpush.bf16.msra.mxu0 %v2949
      %2959 = vmatmul.bf16.gmra.mxu0 %v2937
      %v2960 = vpop.f32.mrf.mxu0
      %v2961 = vadd.f32 %v2914, %v2960
      %v2962 = vpop.f32.mrf.mxu0
      %v2963 = vadd.f32 %v2914, %v2962
      %2964 = vmatmul.bf16.gmra.mxu0 %v2940
      %v2965 = vpop.f32.mrf.mxu0
      %v2966 = vadd.f32 %v2914, %v2965
      %v2967 = vpop.f32.mrf.mxu0
      %v2968 = vadd.f32 %v2914, %v2967
      %2969 = vmatmul.bf16.gmra.mxu0 %v2943
      %v2970 = vpop.f32.mrf.mxu0
      %v2971 = vadd.f32 %v2914, %v2970
      %v2972 = vpop.f32.mrf.mxu0
      %v2973 = vadd.f32 %v2914, %v2972
      %2974 = vmatmul.bf16.gmra.mxu0 %v2946
      %v2975 = vpop.f32.mrf.mxu0
      %v2976 = vadd.f32 %v2914, %v2975
      %v2977 = vpop.f32.mrf.mxu0
      %v2978 = vadd.f32 %v2914, %v2977
      %2979 = vdwg.mxu0
      %v2980 = vadd.f32 %v2895, %v2961
      %v2981 = vadd.f32 %v2896, %v2963
      %v2982 = vadd.f32 %v2897, %v2966
      %v2983 = vadd.f32 %v2898, %v2968
      %v2984 = vadd.f32 %v2899, %v2971
      %v2985 = vadd.f32 %v2900, %v2973
      %v2986 = vadd.f32 %v2901, %v2976
      %v2987 = vadd.f32 %v2902, %v2978
      %v2988 = vmax.f32 %v2980, 0.0
      %v2989 = vmax.f32 %v2981, 0.0
      %v2990 = vmax.f32 %v2982, 0.0
      %v2991 = vmax.f32 %v2983, 0.0
      %v2992 = vmax.f32 %v2984, 0.0
      %v2993 = vmax.f32 %v2985, 0.0
      %v2994 = vmax.f32 %v2986, 0.0
      %v2995 = vmax.f32 %v2987, 0.0
      %2996 = vst.msk [vmem:[%s419] sm:$0xff] %vm1859, %v2988
      %2997 = vst.msk [vmem:[%s419 + $0x8] sm:$0xff] %vm1859, %v2989
      %2998 = vst.msk [vmem:[%s419 + $0x10] sm:$0xff] %vm1859, %v2990
      %2999 = vst.msk [vmem:[%s419 + $0x18] sm:$0xff] %vm1859, %v2991
      %3000 = vst.msk [vmem:[%s419 + $0x20] sm:$0xff] %vm1859, %v2992
      %3001 = vst.msk [vmem:[%s419 + $0x28] sm:$0xff] %vm1859, %v2993
      %3002 = vst.msk [vmem:[%s419 + $0x30] sm:$0xff] %vm1859, %v2994
      %3003 = vst.msk [vmem:[%s419 + $0x38] sm:$0xff] %vm1859, %v2995
      %p3004 = scmp.lt.s32.totalorder %s21, 1
      %s3005 = scalar_select %p3004, %s21, 1
      %s3006 = smul.addr %s3005, 8
      %s3007 = smul.addr %s3006, 8
      %s3008 = scalar_lea.vmem %s10, %s3007
      // Predicated region
      $region61: #{tpu_custom_call.1} parent=59 // pred_check
        %p3009 = pneg %p269
      $region62: #{tpu_custom_call.1} parent=59 // pred_check_branch
        %3011 = sbr.rel (%p3009) target = $region64
      $region63: #{tpu_custom_call.1} parent=59 // pred_region
        _
      $region64: #{tpu_custom_call.1} parent=59 // pred_fallthru
        _
    $region60: #{tpu_custom_call.1} parent=5 // pred_fallthru
      _
    %p3012 = scmp.le.s32.totalorder 2, %s16
    // Predicated region
    $region65: #{tpu_custom_call.1} parent=5 // pred_check
      %p3013 = pneg %p3012
    $region66: #{tpu_custom_call.1} parent=5 // pred_check_branch
      %3015 = sbr.rel (%p3013) target = $region68
    $region67: #{tpu_custom_call.1} parent=5 // pred_region
      %s3016 = ssub.s32 %s16, 2
      // Predicated region
      $region69: #{tpu_custom_call.1} parent=67 // pred_check
        %p3017 = pneg %p275
      $region70: #{tpu_custom_call.1} parent=67 // pred_check_branch
        %3019 = sbr.rel (%p3017) target = $region72
      $region71: #{tpu_custom_call.1} parent=67 // pred_region
        %p3020 = scmp.lt.s32.totalorder %s22, 1
        %s3021 = scalar_select %p3020, %s22, 1
        %s3022 = smul.addr %s3021, 8
        %s3023 = smul.addr %s3022, 8
        %s3024 = scalar_lea.vmem %s10, %s3023
      $region72: #{tpu_custom_call.1} parent=67 // pred_fallthru
        _
    $region68: #{tpu_custom_call.1} parent=5 // pred_fallthru
      _
  $region6: #{tpu_custom_call.1} parent=0 // loop_footer
    %s20 = sadd.s32 1, %s16
  $region7: #{tpu_custom_call.1} parent=0 // loop_footer_branch
    %15 = sbr.rel target = $region3
  $region8: #{tpu_custom_call.1} parent=0 // loop_exit
    _

</llo_original>
